<compile_context>
chip_gen: v5e
topology: v5e:2x2
jax: 0.10.0
libtpu: 0.0.40
codegen_flags: <defaults>
</compile_context>

<pallas_src>
import functools

import jax
import jax.numpy as jnp
from jax import lax
from jax.experimental import pallas as pl
from jax.experimental.pallas import tpu as pltpu

EPS = 1e-5
_VMEM_LIMIT = 48 * 1024 * 1024   # fits v7x (64 MiB physical) and below


def _conv_stats_kernel(x_ref, w_ref, b_ref, conv_ref, sum_ref, ssq_ref,
                       acc_ref, *, W, Wq):
    # x_ref   : (1, TC, LF)    flat zero-padded image, one Cin block
    # w_ref   : (Cout, TC*9)   conv weights, column = ci*9 + kh*3 + kw
    # b_ref   : (Cout, 1)      conv bias
    # conv_ref: (1, Cout, M)   conv+bias output, M = H*Wq (padded-width flat)
    # sum_ref : (1, Cout, 1)   per-image per-channel sum   (valid pixels only)
    # ssq_ref : (1, Cout, 1)   per-image per-channel sumsq (valid pixels only)
    # acc_ref : (Cout, M)      f32 VMEM scratch accumulator over Cin blocks
    c = pl.program_id(1)
    num_c = pl.num_programs(1)
    M = conv_ref.shape[2]
    TC = x_ref.shape[1]

    x = x_ref[0]                                          # (TC, LF)
    # 9 shifted taps = 9 contiguous lane slices; stacked channel-major so the
    # row order matches the (Cout, Cin*9) weight layout -> ONE MXU matmul.
    taps = [x[:, kh * Wq + kw: kh * Wq + kw + M]
            for kh in range(3) for kw in range(3)]        # each (TC, M)
    im2col = jnp.stack(taps, axis=1).reshape(TC * 9, M)   # (TC*9, M)
    part = jnp.dot(w_ref[...], im2col,
                   preferred_element_type=jnp.float32)    # (Cout, M), lane-dense

    @pl.when(c == 0)
    def _():
        acc_ref[...] = jnp.zeros_like(acc_ref)

    acc_ref[...] += part

    @pl.when(c == num_c - 1)
    def _():
        y = acc_ref[...] + b_ref[...]                     # (Cout, M) + (Cout, 1)
        conv_ref[...] = y[None]
        # BatchNorm batch statistics: mask out the 2 halo lanes of each row.
        col = lax.broadcasted_iota(jnp.int32, y.shape, 1)
        valid = (col % Wq) < W
        yv = jnp.where(valid, y, 0.0)
        sum_ref[...] = jnp.sum(yv, axis=1, keepdims=True)[None]
        ssq_ref[...] = jnp.sum(yv * yv, axis=1, keepdims=True)[None]


def _bn_relu_kernel(conv_ref, scale_ref, shift_ref, o_ref):
    # conv_ref : (1, Cout, TH, Wq)  conv+bias rows, padded-width layout
    # scale_ref: (Cout, 1, 1)       gamma * rsqrt(var + eps)
    # shift_ref: (Cout, 1, 1)       beta - mean * scale
    # o_ref    : (1, Cout, TH, W)   final NCHW output rows
    W = o_ref.shape[3]
    y = conv_ref[0][:, :, :W]                             # drop halo columns
    y = y * scale_ref[...] + shift_ref[...]
    o_ref[...] = jnp.maximum(y, 0.0)[None]


def _row_tile(h, target=64):
    if h <= target:
        return h
    for t in range(target, 7, -8):
        if h % t == 0:
            return t
    return h


def unit_forward(x_nchw, w_oihw, bias, gamma, beta):
    """Forward of `Unit`.  x_nchw: (N, Cin, H, W) f32 -> (N, Cout, H, W) f32."""
    N, Cin, H, W = x_nchw.shape
    Cout = w_oihw.shape[0]
    Hq, Wq = H + 3, W + 2        # 1-px halo (+1 extra bottom row so every
    M = H * Wq                   # tap's contiguous flat slice stays in bounds)
    LF = Hq * Wq

    # Host-side glue (no NCHW<->NHWC transposes): pad once, flatten spatial
    # dims (free reshape), flatten weights to a Cin-block-sliceable matrix.
    # TODO(synk): fold the halo pad into the kernel via overlapping
    #             element-indexed row blocks to avoid this one HBM copy.
    xp = jnp.pad(x_nchw, ((0, 0), (0, 0), (1, 2), (1, 1)))
    x_flat = xp.reshape(N, Cin, LF)
    w_flat = w_oihw.reshape(Cout, Cin * 9).astype(jnp.float32)
    b2 = bias.reshape(Cout, 1).astype(jnp.float32)

    # Cin-block (contraction) tiling: last grid axis, VMEM-scratch accumulated.
    TC = 128 if (Cin > 128 and Cin % 128 == 0) else Cin
    n_cblk = Cin // TC

    kern1 = functools.partial(_conv_stats_kernel, W=W, Wq=Wq)
    conv, csum, cssq = pl.pallas_call(
        kern1,
        out_shape=(jax.ShapeDtypeStruct((N, Cout, M), jnp.float32),
                   jax.ShapeDtypeStruct((N, Cout, 1), jnp.float32),
                   jax.ShapeDtypeStruct((N, Cout, 1), jnp.float32)),
        grid_spec=pltpu.PrefetchScalarGridSpec(
            num_scalar_prefetch=0,
            grid=(N, n_cblk),
            in_specs=[
                pl.BlockSpec((1, TC, LF), lambda n, c: (n, c, 0)),
                pl.BlockSpec((Cout, TC * 9), lambda n, c: (0, c)),
                pl.BlockSpec((Cout, 1), lambda n, c: (0, 0)),
            ],
            out_specs=(
                pl.BlockSpec((1, Cout, M), lambda n, c: (n, 0, 0)),
                pl.BlockSpec((1, Cout, 1), lambda n, c: (n, 0, 0)),
                pl.BlockSpec((1, Cout, 1), lambda n, c: (n, 0, 0)),
            ),
            scratch_shapes=[pltpu.VMEM((Cout, M), jnp.float32)],
        ),
        compiler_params=pltpu.CompilerParams(
            dimension_semantics=("parallel", "arbitrary"),
            vmem_limit_bytes=_VMEM_LIMIT),
        cost_estimate=pl.CostEstimate(
            flops=2 * N * H * W * 9 * Cin * Cout,
            transcendentals=0,
            bytes_accessed=4 * (N * Cin * LF + Cout * Cin * 9
                                + N * Cout * (M + 2))),
    )(x_flat, w_flat, b2)

    # Tiny O(Cout) reduction + affine folding of the batch statistics.
    cnt = jnp.float32(N * H * W)
    mean = jnp.sum(csum[:, :, 0], axis=0) / cnt                 # (Cout,)
    var = jnp.sum(cssq[:, :, 0], axis=0) / cnt - mean * mean    # biased var
    scale = gamma.astype(jnp.float32) * lax.rsqrt(var + EPS)
    shift = beta.astype(jnp.float32) - mean * scale

    conv4 = conv.reshape(N, Cout, H, Wq)                        # free reshape
    TH = _row_tile(H)
    out = pl.pallas_call(
        _bn_relu_kernel,
        out_shape=jax.ShapeDtypeStruct((N, Cout, H, W), jnp.float32),
        grid_spec=pltpu.PrefetchScalarGridSpec(
            num_scalar_prefetch=0,
            grid=(N, H // TH),
            in_specs=[
                pl.BlockSpec((1, Cout, TH, Wq), lambda n, r: (n, 0, r, 0)),
                pl.BlockSpec((Cout, 1, 1), lambda n, r: (0, 0, 0)),
                pl.BlockSpec((Cout, 1, 1), lambda n, r: (0, 0, 0)),
            ],
            out_specs=pl.BlockSpec((1, Cout, TH, W), lambda n, r: (n, 0, r, 0)),
        ),
        compiler_params=pltpu.CompilerParams(
            dimension_semantics=("parallel", "parallel"),
            vmem_limit_bytes=_VMEM_LIMIT),
        cost_estimate=pl.CostEstimate(
            flops=3 * N * Cout * H * W,
            transcendentals=0,
            bytes_accessed=4 * (N * Cout * M + N * Cout * H * W)),
    )(conv4, scale.reshape(Cout, 1, 1), shift.reshape(Cout, 1, 1))

    return out


def unit_reference(x_nchw, w_oihw, bias, gamma, beta):
    """Pure-JAX reference (PyTorch training-mode semantics)."""
    y = lax.conv_general_dilated(
        x_nchw, w_oihw, window_strides=(1, 1), padding=((1, 1), (1, 1)),
        dimension_numbers=("NCHW", "OIHW", "NCHW"))
    y = y + bias[None, :, None, None]
    mean = jnp.mean(y, axis=(0, 2, 3), keepdims=True)
    var = jnp.mean((y - mean) ** 2, axis=(0, 2, 3), keepdims=True)
    y = (y - mean) * lax.rsqrt(var + EPS)
    y = y * gamma[None, :, None, None] + beta[None, :, None, None]
    return jnp.maximum(y, 0.0)


if __name__ == "__main__":
    # Small shapes consistent with the module: batch=2, Cin=4, Cout=8, 16x16.
    N, Cin, Cout, H, W = 2, 4, 8, 16, 16

    key = jax.random.PRNGKey(0)
    kx, kw, kb = jax.random.split(key, 3)

    x = jax.random.normal(kx, (N, Cin, H, W), jnp.float32)
    conv_w = jax.random.normal(kw, (Cout, Cin, 3, 3), jnp.float32) * 0.1
    conv_b = jax.random.normal(kb, (Cout,), jnp.float32) * 0.1
    bn_gamma = jnp.ones((Cout,), jnp.float32)   # nn.BatchNorm2d default
    bn_beta = jnp.zeros((Cout,), jnp.float32)   # nn.BatchNorm2d default

    unit_fn = jax.jit(unit_forward)
    out = jax.block_until_ready(unit_fn(x, conv_w, conv_b, bn_gamma, bn_beta))

    ref = unit_reference(x, conv_w, conv_b, bn_gamma, bn_beta)
    assert out.shape == (N, Cout, H, W)
    assert jnp.allclose(out, ref, atol=2e-4, rtol=2e-4), "mismatch vs reference"

    print("KERNEL_OK")
</pallas_src>

<mosaic_0001>
module attributes {stable_mosaic.version = 11 : i64} {
  func.func @_conv_stats_kernel(%arg0: i32, %arg1: i32, %arg2: memref<1x4x342xf32, #tpu.memory_space<vmem>>, %arg3: memref<8x36xf32, #tpu.memory_space<vmem>>, %arg4: memref<8x1xf32, #tpu.memory_space<vmem>>, %arg5: memref<1x8x288xf32, #tpu.memory_space<vmem>>, %arg6: memref<1x8x1xf32, #tpu.memory_space<vmem>>, %arg7: memref<1x8x1xf32, #tpu.memory_space<vmem>>, %arg8: memref<8x288xf32, #tpu.memory_space<vmem>>) attributes {dimension_semantics = [#tpu.dimension_semantics<parallel>, #tpu.dimension_semantics<arbitrary>], iteration_bounds = array<i64: 2, 1>, scalar_prefetch = 0 : i64, scratch_operands = 1 : i64, tpu.core_type = #tpu.core_type<tc>, window_params = [{transform_indices = @transform_0, window_bounds = array<i64: 1, 4, 342>}, {transform_indices = @transform_1, window_bounds = array<i64: 8, 36>}, {pipeline_mode = #tpu.pipeline_mode<synchronous>, transform_indices = @transform_2, window_bounds = array<i64: 8, 1>}, {transform_indices = @transform_3, window_bounds = array<i64: 1, 8, 288>}, {transform_indices = @transform_4, window_bounds = array<i64: 1, 8, 1>}, {transform_indices = @transform_5, window_bounds = array<i64: 1, 8, 1>}]} {
    %c0 = arith.constant 0 : index
    %c0_0 = arith.constant 0 : index
    %c0_1 = arith.constant 0 : index
    %0 = vector.load %arg2[%c0, %c0_0, %c0_1] : memref<1x4x342xf32, #tpu.memory_space<vmem>>, vector<1x4x342xf32>
    %1 = vector.shape_cast %0 : vector<1x4x342xf32> to vector<4x342xf32>
    %2 = vector.extract_strided_slice %1 {offsets = [0, 0], sizes = [4, 288], strides = [1, 1]} : vector<4x342xf32> to vector<4x288xf32>
    %3 = vector.extract_strided_slice %1 {offsets = [0, 1], sizes = [4, 288], strides = [1, 1]} : vector<4x342xf32> to vector<4x288xf32>
    %4 = vector.extract_strided_slice %1 {offsets = [0, 2], sizes = [4, 288], strides = [1, 1]} : vector<4x342xf32> to vector<4x288xf32>
    %5 = vector.extract_strided_slice %1 {offsets = [0, 18], sizes = [4, 288], strides = [1, 1]} : vector<4x342xf32> to vector<4x288xf32>
    %6 = vector.extract_strided_slice %1 {offsets = [0, 19], sizes = [4, 288], strides = [1, 1]} : vector<4x342xf32> to vector<4x288xf32>
    %7 = vector.extract_strided_slice %1 {offsets = [0, 20], sizes = [4, 288], strides = [1, 1]} : vector<4x342xf32> to vector<4x288xf32>
    %8 = vector.extract_strided_slice %1 {offsets = [0, 36], sizes = [4, 288], strides = [1, 1]} : vector<4x342xf32> to vector<4x288xf32>
    %9 = vector.extract_strided_slice %1 {offsets = [0, 37], sizes = [4, 288], strides = [1, 1]} : vector<4x342xf32> to vector<4x288xf32>
    %10 = vector.extract_strided_slice %1 {offsets = [0, 38], sizes = [4, 288], strides = [1, 1]} : vector<4x342xf32> to vector<4x288xf32>
    %11 = vector.shape_cast %2 : vector<4x288xf32> to vector<4x1x288xf32>
    %12 = vector.shape_cast %3 : vector<4x288xf32> to vector<4x1x288xf32>
    %13 = vector.shape_cast %4 : vector<4x288xf32> to vector<4x1x288xf32>
    %14 = vector.shape_cast %5 : vector<4x288xf32> to vector<4x1x288xf32>
    %15 = vector.shape_cast %6 : vector<4x288xf32> to vector<4x1x288xf32>
    %16 = vector.shape_cast %7 : vector<4x288xf32> to vector<4x1x288xf32>
    %17 = vector.shape_cast %8 : vector<4x288xf32> to vector<4x1x288xf32>
    %18 = vector.shape_cast %9 : vector<4x288xf32> to vector<4x1x288xf32>
    %19 = vector.shape_cast %10 : vector<4x288xf32> to vector<4x1x288xf32>
    %20 = tpu.concatenate %11, %12, %13, %14, %15, %16, %17, %18, %19 in 1 : vector<4x1x288xf32>, vector<4x1x288xf32>, vector<4x1x288xf32>, vector<4x1x288xf32>, vector<4x1x288xf32>, vector<4x1x288xf32>, vector<4x1x288xf32>, vector<4x1x288xf32>, vector<4x1x288xf32> -> vector<4x9x288xf32>
    %21 = vector.shape_cast %20 : vector<4x9x288xf32> to vector<36x288xf32>
    %c0_2 = arith.constant 0 : index
    %c0_3 = arith.constant 0 : index
    %22 = vector.load %arg3[%c0_2, %c0_3] : memref<8x36xf32, #tpu.memory_space<vmem>>, vector<8x36xf32>
    %cst = arith.constant dense<0.000000e+00> : vector<8x288xf32>
    %23 = tpu.matmul %22, %21, %cst {dimension_numbers = #tpu.dot_dimension_numbers<[1], [0], [0], [1], [0, 0, 1, 1], [], []>} : vector<8x36xf32>, vector<36x288xf32>, vector<8x288xf32> -> vector<8x288xf32>
    %c0_i32 = arith.constant 0 : i32
    %24 = arith.cmpi eq, %arg1, %c0_i32 : i32
    %25 = arith.extui %24 : i1 to i32
    %c0_i32_4 = arith.constant 0 : i32
    %26 = arith.cmpi ne, %25, %c0_i32_4 : i32
    scf.if %26 {
      %cst_11 = arith.constant 0.000000e+00 : f32
      %33 = vector.broadcast %cst_11 : f32 to vector<8x288xf32>
      %c0_12 = arith.constant 0 : index
      %c0_13 = arith.constant 0 : index
      %34 = vector.load %arg8[%c0_12, %c0_13] : memref<8x288xf32, #tpu.memory_space<vmem>>, vector<8x288xf32>
      tpu.vector_store %arg8[%c0_12, %c0_13], %33 {strides = array<i32>} : memref<8x288xf32, #tpu.memory_space<vmem>>, vector<8x288xf32>,
    } else {
    }
    %c0_5 = arith.constant 0 : index
    %c0_6 = arith.constant 0 : index
    %27 = vector.load %arg8[%c0_5, %c0_6] : memref<8x288xf32, #tpu.memory_space<vmem>>, vector<8x288xf32>
    %28 = arith.addf %27, %23 : vector<8x288xf32>
    %c0_7 = arith.constant 0 : index
    %c0_8 = arith.constant 0 : index
    %29 = vector.load %arg8[%c0_7, %c0_8] : memref<8x288xf32, #tpu.memory_space<vmem>>, vector<8x288xf32>
    tpu.vector_store %arg8[%c0_7, %c0_8], %28 {strides = array<i32>} : memref<8x288xf32, #tpu.memory_space<vmem>>, vector<8x288xf32>,
    %c0_i32_9 = arith.constant 0 : i32
    %30 = arith.cmpi eq, %arg1, %c0_i32_9 : i32
    %31 = arith.extui %30 : i1 to i32
    %c0_i32_10 = arith.constant 0 : i32
    %32 = arith.cmpi ne, %31, %c0_i32_10 : i32
    scf.if %32 {
      %c0_11 = arith.constant 0 : index
      %c0_12 = arith.constant 0 : index
      %33 = vector.load %arg8[%c0_11, %c0_12] : memref<8x288xf32, #tpu.memory_space<vmem>>, vector<8x288xf32>
      %c0_13 = arith.constant 0 : index
      %c0_14 = arith.constant 0 : index
      %34 = vector.load %arg4[%c0_13, %c0_14] : memref<8x1xf32, #tpu.memory_space<vmem>>, vector<8x1xf32>
      %35 = vector.broadcast %34 : vector<8x1xf32> to vector<8x288xf32>
      %36 = arith.addf %33, %35 : vector<8x288xf32>
      %37 = vector.shape_cast %36 : vector<8x288xf32> to vector<1x8x288xf32>
      %c0_15 = arith.constant 0 : index
      %c0_16 = arith.constant 0 : index
      %c0_17 = arith.constant 0 : index
      %38 = vector.load %arg5[%c0_15, %c0_16, %c0_17] : memref<1x8x288xf32, #tpu.memory_space<vmem>>, vector<1x8x288xf32>
      tpu.vector_store %arg5[%c0_15, %c0_16, %c0_17], %37 {strides = array<i32>} : memref<1x8x288xf32, #tpu.memory_space<vmem>>, vector<1x8x288xf32>,
      %39 = tpu.iota {dimensions = array<i32: 1>} : vector<8x288xi32>
      %c18_i32 = arith.constant 18 : i32
      %c0_i32_18 = arith.constant 0 : i32
      %40 = arith.cmpi eq, %c18_i32, %c0_i32_18 : i32
      %c1_i32 = arith.constant 1 : i32
      %41 = arith.select %40, %c1_i32, %c18_i32 : i32
      %42 = vector.broadcast %41 : i32 to vector<8x288xi32>
      %43 = arith.remsi %39, %42 : vector<8x288xi32>
      %c0_i32_19 = arith.constant 0 : i32
      %44 = vector.broadcast %c0_i32_19 : i32 to vector<8x288xi32>
      %45 = arith.cmpi ne, %43, %44 : vector<8x288xi32>
      %c0_i32_20 = arith.constant 0 : i32
      %46 = vector.broadcast %c0_i32_20 : i32 to vector<8x288xi32>
      %47 = arith.cmpi slt, %43, %46 : vector<8x288xi32>
      %c0_i32_21 = arith.constant 0 : i32
      %48 = arith.cmpi slt, %41, %c0_i32_21 : i32
      %49 = vector.broadcast %48 : i1 to vector<8x288xi1>
      %50 = vector.broadcast %49 : vector<8x288xi1> to vector<8x288xi1>
      %51 = arith.xori %47, %50 : vector<8x288xi1>
      %52 = arith.andi %51, %45 : vector<8x288xi1>
      %53 = vector.broadcast %41 : i32 to vector<8x288xi32>
      %54 = arith.addi %43, %53 : vector<8x288xi32>
      %55 = arith.select %52, %54, %43 : vector<8x288xi1>, vector<8x288xi32>
      %c16_i32 = arith.constant 16 : i32
      %56 = vector.broadcast %c16_i32 : i32 to vector<8x288xi32>
      %57 = arith.cmpi slt, %55, %56 : vector<8x288xi32>
      %cst_22 = arith.constant 0.000000e+00 : f32
      %58 = vector.broadcast %cst_22 : f32 to vector<8x288xf32>
      %59 = arith.select %57, %36, %58 : vector<8x288xi1>, vector<8x288xf32>
      %cst_23 = arith.constant dense<0.000000e+00> : vector<8xf32>
      %60 = vector.multi_reduction <add>, %59, %cst_23 [1] : vector<8x288xf32> to vector<8xf32>
      %61 = vector.shape_cast %60 : vector<8xf32> to vector<8x1xf32>
      %62 = vector.shape_cast %61 : vector<8x1xf32> to vector<1x8x1xf32>
      %c0_24 = arith.constant 0 : index
      %c0_25 = arith.constant 0 : index
      %c0_26 = arith.constant 0 : index
      %63 = vector.load %arg6[%c0_24, %c0_25, %c0_26] : memref<1x8x1xf32, #tpu.memory_space<vmem>>, vector<1x8x1xf32>
      tpu.vector_store %arg6[%c0_24, %c0_25, %c0_26], %62 {strides = array<i32>} : memref<1x8x1xf32, #tpu.memory_space<vmem>>, vector<1x8x1xf32>,
      %64 = arith.mulf %59, %59 : vector<8x288xf32>
      %cst_27 = arith.constant dense<0.000000e+00> : vector<8xf32>
      %65 = vector.multi_reduction <add>, %64, %cst_27 [1] : vector<8x288xf32> to vector<8xf32>
      %66 = vector.shape_cast %65 : vector<8xf32> to vector<8x1xf32>
      %67 = vector.shape_cast %66 : vector<8x1xf32> to vector<1x8x1xf32>
      %c0_28 = arith.constant 0 : index
      %c0_29 = arith.constant 0 : index
      %c0_30 = arith.constant 0 : index
      %68 = vector.load %arg7[%c0_28, %c0_29, %c0_30] : memref<1x8x1xf32, #tpu.memory_space<vmem>>, vector<1x8x1xf32>
      tpu.vector_store %arg7[%c0_28, %c0_29, %c0_30], %67 {strides = array<i32>} : memref<1x8x1xf32, #tpu.memory_space<vmem>>, vector<1x8x1xf32>,
    } else {
    }
    return
  }
  func.func @transform_0(%arg0: i32, %arg1: i32) -> (i32, i32, i32) {
    %c0_i32 = arith.constant 0 : i32
    %c0_i32_0 = arith.constant 0 : i32
    return %arg0, %arg1, %c0_i32 : i32, i32, i32
  }
  func.func @transform_1(%arg0: i32, %arg1: i32) -> (i32, i32) {
    %c0_i32 = arith.constant 0 : i32
    %c0_i32_0 = arith.constant 0 : i32
    return %c0_i32, %arg1 : i32, i32
  }
  func.func @transform_2(%arg0: i32, %arg1: i32) -> (i32, i32) {
    %c0_i32 = arith.constant 0 : i32
    %c0_i32_0 = arith.constant 0 : i32
    %c0_i32_1 = arith.constant 0 : i32
    return %c0_i32, %c0_i32_0 : i32, i32
  }
  func.func @transform_3(%arg0: i32, %arg1: i32) -> (i32, i32, i32) {
    %c0_i32 = arith.constant 0 : i32
    %c0_i32_0 = arith.constant 0 : i32
    %c0_i32_1 = arith.constant 0 : i32
    return %arg0, %c0_i32, %c0_i32_0 : i32, i32, i32
  }
  func.func @transform_4(%arg0: i32, %arg1: i32) -> (i32, i32, i32) {
    %c0_i32 = arith.constant 0 : i32
    %c0_i32_0 = arith.constant 0 : i32
    %c0_i32_1 = arith.constant 0 : i32
    return %arg0, %c0_i32, %c0_i32_0 : i32, i32, i32
  }
  func.func @transform_5(%arg0: i32, %arg1: i32) -> (i32, i32, i32) {
    %c0_i32 = arith.constant 0 : i32
    %c0_i32_0 = arith.constant 0 : i32
    %c0_i32_1 = arith.constant 0 : i32
    return %arg0, %c0_i32, %c0_i32_0 : i32, i32, i32
  }
}

module attributes {stable_mosaic.version = 11 : i64} {
  func.func @_bn_relu_kernel(%arg0: i32, %arg1: i32, %arg2: memref<1x8x16x18xf32, #tpu.memory_space<vmem>>, %arg3: memref<8x1x1xf32, #tpu.memory_space<vmem>>, %arg4: memref<8x1x1xf32, #tpu.memory_space<vmem>>, %arg5: memref<1x8x16x16xf32, #tpu.memory_space<vmem>>) attributes {dimension_semantics = [#tpu.dimension_semantics<parallel>, #tpu.dimension_semantics<parallel>], iteration_bounds = array<i64: 2, 1>, scalar_prefetch = 0 : i64, scratch_operands = 0 : i64, tpu.core_type = #tpu.core_type<tc>, window_params = [{transform_indices = @transform_0, window_bounds = array<i64: 1, 8, 16, 18>}, {pipeline_mode = #tpu.pipeline_mode<synchronous>, transform_indices = @transform_1, window_bounds = array<i64: 8, 1, 1>}, {pipeline_mode = #tpu.pipeline_mode<synchronous>, transform_indices = @transform_2, window_bounds = array<i64: 8, 1, 1>}, {transform_indices = @transform_3, window_bounds = array<i64: 1, 8, 16, 16>}]} {
    %c0 = arith.constant 0 : index
    %c0_0 = arith.constant 0 : index
    %c0_1 = arith.constant 0 : index
    %c0_2 = arith.constant 0 : index
    %0 = vector.load %arg2[%c0, %c0_0, %c0_1, %c0_2] : memref<1x8x16x18xf32, #tpu.memory_space<vmem>>, vector<1x8x16x18xf32>
    %1 = vector.shape_cast %0 : vector<1x8x16x18xf32> to vector<8x16x18xf32>
    %2 = vector.extract_strided_slice %1 {offsets = [0, 0, 0], sizes = [8, 16, 16], strides = [1, 1, 1]} : vector<8x16x18xf32> to vector<8x16x16xf32>
    %c0_3 = arith.constant 0 : index
    %c0_4 = arith.constant 0 : index
    %c0_5 = arith.constant 0 : index
    %3 = vector.load %arg3[%c0_3, %c0_4, %c0_5] : memref<8x1x1xf32, #tpu.memory_space<vmem>>, vector<8x1x1xf32>
    %4 = vector.broadcast %3 : vector<8x1x1xf32> to vector<8x16x16xf32>
    %5 = arith.mulf %2, %4 : vector<8x16x16xf32>
    %c0_6 = arith.constant 0 : index
    %c0_7 = arith.constant 0 : index
    %c0_8 = arith.constant 0 : index
    %6 = vector.load %arg4[%c0_6, %c0_7, %c0_8] : memref<8x1x1xf32, #tpu.memory_space<vmem>>, vector<8x1x1xf32>
    %7 = vector.broadcast %6 : vector<8x1x1xf32> to vector<8x16x16xf32>
    %8 = arith.addf %5, %7 : vector<8x16x16xf32>
    %cst = arith.constant 0.000000e+00 : f32
    %9 = vector.broadcast %cst : f32 to vector<8x16x16xf32>
    %10 = arith.maximumf %8, %9 : vector<8x16x16xf32>
    %11 = vector.shape_cast %10 : vector<8x16x16xf32> to vector<1x8x16x16xf32>
    %c0_9 = arith.constant 0 : index
    %c0_10 = arith.constant 0 : index
    %c0_11 = arith.constant 0 : index
    %c0_12 = arith.constant 0 : index
    %12 = vector.load %arg5[%c0_9, %c0_10, %c0_11, %c0_12] : memref<1x8x16x16xf32, #tpu.memory_space<vmem>>, vector<1x8x16x16xf32>
    tpu.vector_store %arg5[%c0_9, %c0_10, %c0_11, %c0_12], %11 {strides = array<i32>} : memref<1x8x16x16xf32, #tpu.memory_space<vmem>>, vector<1x8x16x16xf32>,
    return
  }
  func.func @transform_0(%arg0: i32, %arg1: i32) -> (i32, i32, i32, i32) {
    %c0_i32 = arith.constant 0 : i32
    %c0_i32_0 = arith.constant 0 : i32
    %c0_i32_1 = arith.constant 0 : i32
    return %arg0, %c0_i32, %arg1, %c0_i32_0 : i32, i32, i32, i32
  }
  func.func @transform_1(%arg0: i32, %arg1: i32) -> (i32, i32, i32) {
    %c0_i32 = arith.constant 0 : i32
    %c0_i32_0 = arith.constant 0 : i32
    %c0_i32_1 = arith.constant 0 : i32
    %c0_i32_2 = arith.constant 0 : i32
    return %c0_i32, %c0_i32_0, %c0_i32_1 : i32, i32, i32
  }
  func.func @transform_2(%arg0: i32, %arg1: i32) -> (i32, i32, i32) {
    %c0_i32 = arith.constant 0 : i32
    %c0_i32_0 = arith.constant 0 : i32
    %c0_i32_1 = arith.constant 0 : i32
    %c0_i32_2 = arith.constant 0 : i32
    return %c0_i32, %c0_i32_0, %c0_i32_1 : i32, i32, i32
  }
  func.func @transform_3(%arg0: i32, %arg1: i32) -> (i32, i32, i32, i32) {
    %c0_i32 = arith.constant 0 : i32
    %c0_i32_0 = arith.constant 0 : i32
    %c0_i32_1 = arith.constant 0 : i32
    return %arg0, %c0_i32, %arg1, %c0_i32_0 : i32, i32, i32, i32
  }
}

</mosaic_0001>

<llo_original>
// kernel: unit_forward.3
$region0: #{unit_forward.3}
  #allocation0 [shape = 'u32[]', space=smem, size = 0x4, offset = 0x4, fixed_abs, tag = 'smem constant byte address 0x4 - core index']
  #allocation1 [shape = 'u32[72,128]{1,0:T(1,128)}', space=vmem, size = 0x9000, scoped, tag = 'internal scratch']
  %s0 = inlined_call_operand.vmem [shape: f32[2,8,16,18], index: 0, kind: input, shape index: {}]
  %s1 = inlined_call_operand.vmem [shape: f32[8,1,1], index: 1, kind: input, shape index: {}]
  %s2 = inlined_call_operand.vmem [shape: f32[8,1,1], index: 2, kind: input, shape index: {}]
  %s3 = inlined_call_operand.hbm [shape: f32[2,8,16,16], index: 3, kind: output, shape index: {}]
  %s4 = sld [smem:[#allocation0]]
  $region45: #{unit_forward.3} parent=0
    _
  %s6 = ssub.s32 1, %s4
  %s7 = scalar_select 0, %s6, %s4
  $region1: #{unit_forward.3} parent=0
    #allocation2 [shape = 'u8[131072]{0}', space=vmem, size = 0x20000, scoped, tag = 'output window, operand 0']
    #allocation3 [shape = 's32[2]{0}', space=sflag, size = 0x8, scoped, tag = 'scoped memory for unit_forward.3']
    %8 = vsyncpa [#allocation3], 0
    %s9 = scalar_lea.sflag [#allocation3], 1
    %10 = vsyncpa %s9, 0
    loop: start=0, step=1, limit=4
    $region2: #{unit_forward.3} parent=1 // loop_pre_header
      _
    $region3: #{unit_forward.3} parent=1 // loop_header
      %s12 = sphi 0, %s16
      %p13 = scmp.ge.s32.totalorder %s12, 4
      %s19 = sphi 0, %s31
      %s20 = sphi 0, %s27
      %s21 = sphi 0, %s19
      %s22 = sphi 0, %s20
      %s23 = sphi 0, %s21
      %s24 = sphi 0, %s22
      %s36 = sphi 0, %s38
      %s39 = sphi 0, %s36
      %s40 = sphi 0, %s39
      %s56 = sphi 0, %s40
      %s60 = sphi 0, %s60
      %s62 = sphi 0, %s60
      %s63 = sphi 0, %s62
      %s77 = sphi 0, %s63
      %s81 = sphi 0, %s81
      %s83 = sphi 0, %s81
      %s84 = sphi 0, %s83
      %s98 = sphi 0, %s84
      %s106 = sphi 0, %s108
      %s109 = sphi 0, %s106
      %s110 = sphi 0, %s109
      %s126 = sphi 0, %s110
    $region4: #{unit_forward.3} parent=1 // loop_header_branch
      %15 = sbr.rel (%p13) target = $region8
    $region5: #{unit_forward.3} parent=1 // loop_body
      %s17 = ssub.s32 %s12, 1
      %s18 = ssub.s32 %s12, 2
      %s25 = sadd.s32 1, %s20
      %p26 = scmp.ge.s32.totalorder %s25, 1
      %s27 = scalar_select %p26, 0, %s25
      %s28 = sadd.s32 1, %s19
      %s29 = scalar_select %p26, %s28, %s19
      %p30 = scmp.ge.s32.totalorder %s29, 2
      %s31 = scalar_select %p30, 0, %s29
      %s32 = ssub.s32 %s19, %s31
      %s33 = ssub.s32 %s20, %s27
      %s34 = sor.u32 %s32, %s33
      %p35 = scmp.eq.s32.totalorder %s34, 0
      %s37 = sadd.s32 %s36, 1
      %s38 = scalar_select %p35, %s36, %s37
      %p41 = pneg %p35
      %p42 = scmp.eq.s32.totalorder %s12, 1
      %p43 = por %p41, %p42
      %p44 = scmp.ne.s32.totalorder %s36, %s39
      %p45 = scmp.eq.s32.totalorder %s12, 0
      %p46 = por %p44, %p45
      %p47 = scmp.ne.s32.totalorder %s36, %s39
      %p48 = scmp.eq.s32.totalorder %s17, 1
      %p49 = por %p47, %p48
      %p50 = scmp.ne.s32.totalorder %s39, %s40
      %p51 = scmp.eq.s32.totalorder %s17, 0
      %p52 = por %p50, %p51
      %p53 = scmp.ne.s32.totalorder %s39, %s40
      %p54 = scmp.eq.s32.totalorder %s18, 1
      %p55 = por %p53, %p54
      %p57 = scmp.ne.s32.totalorder %s40, %s56
      %p58 = scmp.eq.s32.totalorder %s18, 0
      %p59 = por %p57, %p58
      %s61 = sadd.s32 %s60, 1
      %p64 = scmp.eq.s32.totalorder %s12, 1
      %p65 = scmp.ne.s32.totalorder %s60, %s62
      %p66 = scmp.eq.s32.totalorder %s12, 0
      %p67 = por %p65, %p66
      %p68 = scmp.ne.s32.totalorder %s60, %s62
      %p69 = scmp.eq.s32.totalorder %s17, 1
      %p70 = por %p68, %p69
      %p71 = scmp.ne.s32.totalorder %s62, %s63
      %p72 = scmp.eq.s32.totalorder %s17, 0
      %p73 = por %p71, %p72
      %p74 = scmp.ne.s32.totalorder %s62, %s63
      %p75 = scmp.eq.s32.totalorder %s18, 1
      %p76 = por %p74, %p75
      %p78 = scmp.ne.s32.totalorder %s63, %s77
      %p79 = scmp.eq.s32.totalorder %s18, 0
      %p80 = por %p78, %p79
      %s82 = sadd.s32 %s81, 1
      %p85 = scmp.eq.s32.totalorder %s12, 1
      %p86 = scmp.ne.s32.totalorder %s81, %s83
      %p87 = scmp.eq.s32.totalorder %s12, 0
      %p88 = por %p86, %p87
      %p89 = scmp.ne.s32.totalorder %s81, %s83
      %p90 = scmp.eq.s32.totalorder %s17, 1
      %p91 = por %p89, %p90
      %p92 = scmp.ne.s32.totalorder %s83, %s84
      %p93 = scmp.eq.s32.totalorder %s17, 0
      %p94 = por %p92, %p93
      %p95 = scmp.ne.s32.totalorder %s83, %s84
      %p96 = scmp.eq.s32.totalorder %s18, 1
      %p97 = por %p95, %p96
      %p99 = scmp.ne.s32.totalorder %s84, %s98
      %p100 = scmp.eq.s32.totalorder %s18, 0
      %p101 = por %p99, %p100
      %s102 = ssub.s32 %s19, %s31
      %s103 = ssub.s32 %s20, %s27
      %s104 = sor.u32 %s102, %s103
      %p105 = scmp.eq.s32.totalorder %s104, 0
      %s107 = sadd.s32 %s106, 1
      %s108 = scalar_select %p105, %s106, %s107
      %p111 = pneg %p105
      %p112 = scmp.eq.s32.totalorder %s12, 1
      %p113 = por %p111, %p112
      %p114 = scmp.ne.s32.totalorder %s106, %s109
      %p115 = scmp.eq.s32.totalorder %s12, 0
      %p116 = por %p114, %p115
      %p117 = scmp.ne.s32.totalorder %s106, %s109
      %p118 = scmp.eq.s32.totalorder %s17, 1
      %p119 = por %p117, %p118
      %p120 = scmp.ne.s32.totalorder %s109, %s110
      %p121 = scmp.eq.s32.totalorder %s17, 0
      %p122 = por %p120, %p121
      %p123 = scmp.ne.s32.totalorder %s109, %s110
      %p124 = scmp.eq.s32.totalorder %s18, 1
      %p125 = por %p123, %p124
      %p127 = scmp.ne.s32.totalorder %s110, %s126
      %p128 = scmp.eq.s32.totalorder %s18, 0
      %p129 = por %p127, %p128
      %p130 = scmp.le.s32.totalorder 1, %s12
      %p131 = scmp.lt.s32.totalorder %s12, 3
      %p132 = pnand %p130, %p131
      %p133 = pneg %p132
      // Predicated region
      $region9: #{unit_forward.3} parent=5 // pred_check
        _
      $region10: #{unit_forward.3} parent=5 // pred_check_branch
        %135 = sbr.rel (%p132) target = $region12
      $region11: #{unit_forward.3} parent=5 // pred_region
        %s136 = ssub.s32 %s12, 1
        // Predicated region
        $region13: #{unit_forward.3} parent=11 // pred_check
          %p137 = pneg %p73
        $region14: #{unit_forward.3} parent=11 // pred_check_branch
          %139 = sbr.rel (%p137) target = $region16
        $region15: #{unit_forward.3} parent=11 // pred_region
          _
        $region16: #{unit_forward.3} parent=11 // pred_fallthru
          _
        // Predicated region
        $region17: #{unit_forward.3} parent=11 // pred_check
          %p140 = pneg %p94
        $region18: #{unit_forward.3} parent=11 // pred_check_branch
          %142 = sbr.rel (%p140) target = $region20
        $region19: #{unit_forward.3} parent=11 // pred_region
          _
        $region20: #{unit_forward.3} parent=11 // pred_fallthru
          _
      $region12: #{unit_forward.3} parent=5 // pred_fallthru
        _
      %p143 = scmp.lt.s32.totalorder %s12, 2
      // Predicated region
      $region21: #{unit_forward.3} parent=5 // pred_check
        %p144 = pneg %p143
      $region22: #{unit_forward.3} parent=5 // pred_check_branch
        %146 = sbr.rel (%p144) target = $region24
      $region23: #{unit_forward.3} parent=5 // pred_region
        // Predicated region
        $region25: #{unit_forward.3} parent=23 // pred_check
          %p147 = pneg %p46
        $region26: #{unit_forward.3} parent=23 // pred_check_branch
          %149 = sbr.rel (%p147) target = $region28
        $region27: #{unit_forward.3} parent=23 // pred_region
          %s150 = smul.u32 2, %s20
          %p151 = scmp.lt.s32.totalorder %s19, 1
          %s152 = scalar_select %p151, %s19, 1
          %p153 = scmp.lt.s32.totalorder %s150, 1
          %s154 = scalar_select %p153, %s150, 1
          %s155 = smul.addr %s152, 16
          %s156 = sadd.s32 %s154, %s155
          %s157 = smul.addr %s156, 8
          %s158 = scalar_lea.vmem %s0, %s157
          %s159 = smul.u32 2, %s20
        $region28: #{unit_forward.3} parent=23 // pred_fallthru
          _
      $region24: #{unit_forward.3} parent=5 // pred_fallthru
        _
      %p160 = scmp.le.s32.totalorder 1, %s12
      %p161 = scmp.lt.s32.totalorder %s12, 3
      %p162 = pnand %p160, %p161
      %p163 = pneg %p162
      // Predicated region
      $region29: #{unit_forward.3} parent=5 // pred_check
        _
      $region30: #{unit_forward.3} parent=5 // pred_check_branch
        %165 = sbr.rel (%p162) target = $region32
      $region31: #{unit_forward.3} parent=5 // pred_region
        %s166 = ssub.s32 %s12, 1
        %s167 = smul.u32 2, %s22
        %p168 = scmp.lt.s32.totalorder %s21, 1
        %s169 = scalar_select %p168, %s21, 1
        %p170 = scmp.lt.s32.totalorder %s167, 1
        %s171 = scalar_select %p170, %s167, 1
        %s172 = smul.addr %s169, 16
        %s173 = sadd.s32 %s171, %s172
        %s174 = smul.addr %s173, 8
        %s175 = scalar_lea.vmem %s0, %s174
        %p176 = pneg %p52
        %p177 = pneg %p49
        %p178 = pneg %p73
        %p179 = pneg %p70
        %p180 = pneg %p94
        %p181 = pneg %p91
        %p182 = pneg %p122
        %p183 = pneg %p119
        %s184 = sand.u32 %s109, 1
        %s185 = scalar_lea.sflag [#allocation3], %s184
        %s186 = sand.u32 %s109, 1
        %s187 = smul.addr %s186, 128
        %s188 = scalar_lea.vmem [#allocation2], %s187
        %s189 = smul.u32 2, %s22
        %p190 = scmp.lt.s32.totalorder %s21, 1
        %s191 = scalar_select %p190, %s21, 1
        %p192 = scmp.lt.s32.totalorder %s189, 1
        %s193 = scalar_select %p192, %s189, 1
        %s194 = smul.addr %s191, 16
        %s195 = sadd.s32 %s193, %s194
        %s196 = smul.addr %s195, 8
        %s197 = scalar_lea.vmem %s0, %s196
        %s198 = smul.u32 2, %s22
        %s199 = smul.u32 2, %s22
        %v200 = vld [vmem:[%s197] sm:$0xff]
        %v201 = vld [vmem:[%s197 + $0x8] sm:$0xff]
        %v202 = vld [vmem:[%s197 + $0x10] sm:$0xff]
        %v203 = vld [vmem:[%s197 + $0x18] sm:$0xff]
        %v204 = vld [vmem:[%s197 + $0x20] sm:$0xff]
        %v205 = vld [vmem:[%s197 + $0x28] sm:$0xff]
        %v206 = vld [vmem:[%s197 + $0x30] sm:$0xff]
        %v207 = vld [vmem:[%s197 + $0x38] sm:$0xff]
        %v208 = vld [vmem:[%s197 + $0x40] sm:$0xff]
        %v209 = vld [vmem:[%s197 + $0x48] sm:$0xff]
        %v210 = vld [vmem:[%s197 + $0x50] sm:$0xff]
        %v211 = vld [vmem:[%s197 + $0x58] sm:$0xff]
        %v212 = vld [vmem:[%s197 + $0x60] sm:$0xff]
        %v213 = vld [vmem:[%s197 + $0x68] sm:$0xff]
        %v214 = vld [vmem:[%s197 + $0x70] sm:$0xff]
        %v215 = vld [vmem:[%s197 + $0x78] sm:$0xff]
        %v216 = vld [vmem:[%s1] sm:$0x1]
        %v217 = vld [vmem:[%s1 + $0x1] sm:$0x1]
        %v218 = vld [vmem:[%s1 + $0x2] sm:$0x1]
        %v219 = vld [vmem:[%s1 + $0x3] sm:$0x1]
        %v220 = vld [vmem:[%s1 + $0x4] sm:$0x1]
        %v221 = vld [vmem:[%s1 + $0x5] sm:$0x1]
        %v222 = vld [vmem:[%s1 + $0x6] sm:$0x1]
        %v223 = vld [vmem:[%s1 + $0x7] sm:$0x1]
        %v232 = vperm.slane %v216, 0
        %v233 = vperm.slane %v217, 0
        %v234 = vperm.slane %v218, 0
        %v235 = vperm.slane %v219, 0
        %v236 = vperm.slane %v220, 0
        %v237 = vperm.slane %v221, 0
        %v238 = vperm.slane %v222, 0
        %v239 = vperm.slane %v223, 0
        %240 = vset.pattern.permute.xlu0 0
        %241 = vperm.xlu0 %240, %v232
        %v242 = vpop.permute.xlu0 %241
        %244 = vset.pattern.permute.xlu0 0
        %245 = vperm.xlu0 %244, %v233
        %v246 = vpop.permute.xlu0 %245
        %248 = vset.pattern.permute.xlu0 0
        %249 = vperm.xlu0 %248, %v234
        %v250 = vpop.permute.xlu0 %249
        %252 = vset.pattern.permute.xlu0 0
        %253 = vperm.xlu0 %252, %v235
        %v254 = vpop.permute.xlu0 %253
        %256 = vset.pattern.permute.xlu0 0
        %257 = vperm.xlu0 %256, %v236
        %v258 = vpop.permute.xlu0 %257
        %260 = vset.pattern.permute.xlu0 0
        %261 = vperm.xlu0 %260, %v237
        %v262 = vpop.permute.xlu0 %261
        %264 = vset.pattern.permute.xlu0 0
        %265 = vperm.xlu0 %264, %v238
        %v266 = vpop.permute.xlu0 %265
        %268 = vset.pattern.permute.xlu0 0
        %269 = vperm.xlu0 %268, %v239
        %v270 = vpop.permute.xlu0 %269
        %v272 = vmul.f32 %v200, %v242
        %v273 = vmul.f32 %v201, %v242
        %v274 = vmul.f32 %v202, %v246
        %v275 = vmul.f32 %v203, %v246
        %v276 = vmul.f32 %v204, %v250
        %v277 = vmul.f32 %v205, %v250
        %v278 = vmul.f32 %v206, %v254
        %v279 = vmul.f32 %v207, %v254
        %v280 = vmul.f32 %v208, %v258
        %v281 = vmul.f32 %v209, %v258
        %v282 = vmul.f32 %v210, %v262
        %v283 = vmul.f32 %v211, %v262
        %v284 = vmul.f32 %v212, %v266
        %v285 = vmul.f32 %v213, %v266
        %v286 = vmul.f32 %v214, %v270
        %v287 = vmul.f32 %v215, %v270
        %v288 = vld [vmem:[%s2] sm:$0x1]
        %v289 = vld [vmem:[%s2 + $0x1] sm:$0x1]
        %v290 = vld [vmem:[%s2 + $0x2] sm:$0x1]
        %v291 = vld [vmem:[%s2 + $0x3] sm:$0x1]
        %v292 = vld [vmem:[%s2 + $0x4] sm:$0x1]
        %v293 = vld [vmem:[%s2 + $0x5] sm:$0x1]
        %v294 = vld [vmem:[%s2 + $0x6] sm:$0x1]
        %v295 = vld [vmem:[%s2 + $0x7] sm:$0x1]
        %v304 = vperm.slane %v288, 0
        %v305 = vperm.slane %v289, 0
        %v306 = vperm.slane %v290, 0
        %v307 = vperm.slane %v291, 0
        %v308 = vperm.slane %v292, 0
        %v309 = vperm.slane %v293, 0
        %v310 = vperm.slane %v294, 0
        %v311 = vperm.slane %v295, 0
        %312 = vset.pattern.permute.xlu0 0
        %313 = vperm.xlu0 %312, %v304
        %v314 = vpop.permute.xlu0 %313
        %316 = vset.pattern.permute.xlu0 0
        %317 = vperm.xlu0 %316, %v305
        %v318 = vpop.permute.xlu0 %317
        %320 = vset.pattern.permute.xlu0 0
        %321 = vperm.xlu0 %320, %v306
        %v322 = vpop.permute.xlu0 %321
        %324 = vset.pattern.permute.xlu0 0
        %325 = vperm.xlu0 %324, %v307
        %v326 = vpop.permute.xlu0 %325
        %328 = vset.pattern.permute.xlu0 0
        %329 = vperm.xlu0 %328, %v308
        %v330 = vpop.permute.xlu0 %329
        %332 = vset.pattern.permute.xlu0 0
        %333 = vperm.xlu0 %332, %v309
        %v334 = vpop.permute.xlu0 %333
        %336 = vset.pattern.permute.xlu0 0
        %337 = vperm.xlu0 %336, %v310
        %v338 = vpop.permute.xlu0 %337
        %340 = vset.pattern.permute.xlu0 0
        %341 = vperm.xlu0 %340, %v311
        %v342 = vpop.permute.xlu0 %341
        %v344 = vadd.f32 %v272, %v314
        %v345 = vadd.f32 %v273, %v314
        %v346 = vadd.f32 %v274, %v318
        %v347 = vadd.f32 %v275, %v318
        %v348 = vadd.f32 %v276, %v322
        %v349 = vadd.f32 %v277, %v322
        %v350 = vadd.f32 %v278, %v326
        %v351 = vadd.f32 %v279, %v326
        %v352 = vadd.f32 %v280, %v330
        %v353 = vadd.f32 %v281, %v330
        %v354 = vadd.f32 %v282, %v334
        %v355 = vadd.f32 %v283, %v334
        %v356 = vadd.f32 %v284, %v338
        %v357 = vadd.f32 %v285, %v338
        %v358 = vadd.f32 %v286, %v342
        %v359 = vadd.f32 %v287, %v342
        %v360 = vmax.f32 %v344, 0.0
        %v361 = vmax.f32 %v345, 0.0
        %v362 = vmax.f32 %v346, 0.0
        %v363 = vmax.f32 %v347, 0.0
        %v364 = vmax.f32 %v348, 0.0
        %v365 = vmax.f32 %v349, 0.0
        %v366 = vmax.f32 %v350, 0.0
        %v367 = vmax.f32 %v351, 0.0
        %v368 = vmax.f32 %v352, 0.0
        %v369 = vmax.f32 %v353, 0.0
        %v370 = vmax.f32 %v354, 0.0
        %v371 = vmax.f32 %v355, 0.0
        %v372 = vmax.f32 %v356, 0.0
        %v373 = vmax.f32 %v357, 0.0
        %v374 = vmax.f32 %v358, 0.0
        %v375 = vmax.f32 %v359, 0.0
        %vm376 = vcmask 130048
        %377 = vst.msk [vmem:[%s188] sm:$0xff] %vm376, %v360
        %378 = vst.msk [vmem:[%s188 + $0x8] sm:$0xff] %vm376, %v361
        %379 = vst.msk [vmem:[%s188 + $0x10] sm:$0xff] %vm376, %v362
        %380 = vst.msk [vmem:[%s188 + $0x18] sm:$0xff] %vm376, %v363
        %381 = vst.msk [vmem:[%s188 + $0x20] sm:$0xff] %vm376, %v364
        %382 = vst.msk [vmem:[%s188 + $0x28] sm:$0xff] %vm376, %v365
        %383 = vst.msk [vmem:[%s188 + $0x30] sm:$0xff] %vm376, %v366
        %384 = vst.msk [vmem:[%s188 + $0x38] sm:$0xff] %vm376, %v367
        %385 = vst.msk [vmem:[%s188 + $0x40] sm:$0xff] %vm376, %v368
        %386 = vst.msk [vmem:[%s188 + $0x48] sm:$0xff] %vm376, %v369
        %387 = vst.msk [vmem:[%s188 + $0x50] sm:$0xff] %vm376, %v370
        %388 = vst.msk [vmem:[%s188 + $0x58] sm:$0xff] %vm376, %v371
        %389 = vst.msk [vmem:[%s188 + $0x60] sm:$0xff] %vm376, %v372
        %390 = vst.msk [vmem:[%s188 + $0x68] sm:$0xff] %vm376, %v373
        %391 = vst.msk [vmem:[%s188 + $0x70] sm:$0xff] %vm376, %v374
        %392 = vst.msk [vmem:[%s188 + $0x78] sm:$0xff] %vm376, %v375
        %s393 = sand.u32 %s109, 1
        %s394 = scalar_lea.sflag [#allocation3], %s393
        %s395 = sand.u32 %s109, 1
        %s396 = smul.addr %s395, 128
        %s397 = scalar_lea.vmem [#allocation2], %s396
        // Predicated region
        $region33: #{unit_forward.3} parent=31 // pred_check
          %p398 = pneg %p119
        $region34: #{unit_forward.3} parent=31 // pred_check_branch
          %400 = sbr.rel (%p398) target = $region36
        $region35: #{unit_forward.3} parent=31 // pred_region
          %s401 = smul.u32 2, %s22
          %403 = vsyncadd %s394, 0
          %s404 = smul.addr %s21, 16
          %s405 = sadd.s32 %s401, %s404
          %s406 = smul.addr %s405, 8
          %s407 = scalar_lea.hbm %s3, %s406
          %s408 = sshll.u32 %s397, 4
          %s409 = int_to_ptr.vmem [resolvable:$true] %s408
          %s410 = sshll.u32 %s407, 4
          %s411 = int_to_ptr.hbm [resolvable:$true] %s410
          %416 = dma.vmem_to_hbm [thread:$0]  %s409, 2048, %s411, %s394, 128, 128, 8
        $region36: #{unit_forward.3} parent=31 // pred_fallthru
          _
      $region32: #{unit_forward.3} parent=5 // pred_fallthru
        _
      %p417 = scmp.le.s32.totalorder 2, %s12
      // Predicated region
      $region37: #{unit_forward.3} parent=5 // pred_check
        %p418 = pneg %p417
      $region38: #{unit_forward.3} parent=5 // pred_check_branch
        %420 = sbr.rel (%p418) target = $region40
      $region39: #{unit_forward.3} parent=5 // pred_region
        %s421 = ssub.s32 %s12, 2
        // Predicated region
        $region41: #{unit_forward.3} parent=39 // pred_check
          %p422 = pneg %p125
        $region42: #{unit_forward.3} parent=39 // pred_check_branch
          %424 = sbr.rel (%p422) target = $region44
        $region43: #{unit_forward.3} parent=39 // pred_region
          %s425 = sand.u32 %s110, 1
          %s426 = scalar_lea.sflag [#allocation3], %s425
          %s427 = sand.u32 %s110, 1
          %s428 = smul.addr %s427, 128
          %s429 = scalar_lea.vmem [#allocation2], %s428
          %431 = dma.done %s426, 2048
        $region44: #{unit_forward.3} parent=39 // pred_fallthru
          _
      $region40: #{unit_forward.3} parent=5 // pred_fallthru
        _
    $region6: #{unit_forward.3} parent=1 // loop_footer
      %s16 = sadd.s32 1, %s12
    $region7: #{unit_forward.3} parent=1 // loop_footer_branch
      %11 = sbr.rel target = $region3
    $region8: #{unit_forward.3} parent=1 // loop_exit
      _
    %432 = vsyncpa [#allocation3], 1
    %s433 = scalar_lea.sflag [#allocation3], 1
    %434 = vsyncpa %s433, 1

// kernel: unit_forward.2
$region0: #{unit_forward.2}
  #allocation0 [shape = 'u32[]', space=smem, size = 0x4, offset = 0x4, fixed_abs, tag = 'smem constant byte address 0x4 - core index']
  #allocation1 [shape = 'u32[72,128]{1,0:T(1,128)}', space=vmem, size = 0x9000, scoped, tag = 'internal scratch']
  #allocation2 [shape = 'f32[8,288]{1,0:T(8,128)}', space=vmem, size = 0x3000, scoped, tag = 'scratch operand']
  %s0 = inlined_call_operand.vmem [shape: f32[2,4,342], index: 0, kind: input, shape index: {}]
  %s1 = inlined_call_operand.vmem [shape: f32[8,36], index: 1, kind: input, shape index: {}]
  %s2 = inlined_call_operand.vmem [shape: f32[8,1], index: 2, kind: input, shape index: {}]
  %s3 = inlined_call_operand.vmem [shape: f32[2,8,288], index: 3, kind: output, shape index: {0}]
  %s4 = inlined_call_operand.vmem [shape: f32[2,8,1], index: 4, kind: output, shape index: {1}]
  %s5 = inlined_call_operand.vmem [shape: f32[2,8,1], index: 5, kind: output, shape index: {2}]
  %6 = xla_tuple %s3, %s4, %s5
  %s7 = sld [smem:[#allocation0]]
  $region69: #{unit_forward.2} parent=0
    _
  %s9 = ssub.s32 1, %s7
  %s10 = scalar_select 0, %s9, %s7
  loop: start=0, step=1, limit=4
  $region2: #{unit_forward.2} parent=0 // loop_pre_header
    _
  $region3: #{unit_forward.2} parent=0 // loop_header
    %s12 = sphi 0, %s16
    %p13 = scmp.ge.s32.totalorder %s12, 4
    %s19 = sphi 0, %s31
    %s20 = sphi 0, %s27
    %s21 = sphi 0, %s19
    %s22 = sphi 0, %s20
    %s23 = sphi 0, %s21
    %s24 = sphi 0, %s22
    %s36 = sphi 0, %s38
    %s39 = sphi 0, %s36
    %s40 = sphi 0, %s39
    %s56 = sphi 0, %s40
    %s62 = sphi 0, %s64
    %s65 = sphi 0, %s62
    %s66 = sphi 0, %s65
    %s82 = sphi 0, %s66
    %s86 = sphi 0, %s86
    %s88 = sphi 0, %s86
    %s89 = sphi 0, %s88
    %s103 = sphi 0, %s89
    %s109 = sphi 0, %s111
    %s112 = sphi 0, %s109
    %s113 = sphi 0, %s112
    %s129 = sphi 0, %s113
    %s135 = sphi 0, %s137
    %s138 = sphi 0, %s135
    %s139 = sphi 0, %s138
    %s155 = sphi 0, %s139
    %s161 = sphi 0, %s163
    %s164 = sphi 0, %s161
    %s165 = sphi 0, %s164
    %s181 = sphi 0, %s165
  $region4: #{unit_forward.2} parent=0 // loop_header_branch
    %15 = sbr.rel (%p13) target = $region8
  $region5: #{unit_forward.2} parent=0 // loop_body
    %s17 = ssub.s32 %s12, 1
    %s18 = ssub.s32 %s12, 2
    %s25 = sadd.s32 1, %s20
    %p26 = scmp.ge.s32.totalorder %s25, 1
    %s27 = scalar_select %p26, 0, %s25
    %s28 = sadd.s32 1, %s19
    %s29 = scalar_select %p26, %s28, %s19
    %p30 = scmp.ge.s32.totalorder %s29, 2
    %s31 = scalar_select %p30, 0, %s29
    %s32 = ssub.s32 %s19, %s31
    %s33 = ssub.s32 %s20, %s27
    %s34 = sor.u32 %s32, %s33
    %p35 = scmp.eq.s32.totalorder %s34, 0
    %s37 = sadd.s32 %s36, 1
    %s38 = scalar_select %p35, %s36, %s37
    %p41 = pneg %p35
    %p42 = scmp.eq.s32.totalorder %s12, 1
    %p43 = por %p41, %p42
    %p44 = scmp.ne.s32.totalorder %s36, %s39
    %p45 = scmp.eq.s32.totalorder %s12, 0
    %p46 = por %p44, %p45
    %p47 = scmp.ne.s32.totalorder %s36, %s39
    %p48 = scmp.eq.s32.totalorder %s17, 1
    %p49 = por %p47, %p48
    %p50 = scmp.ne.s32.totalorder %s39, %s40
    %p51 = scmp.eq.s32.totalorder %s17, 0
    %p52 = por %p50, %p51
    %p53 = scmp.ne.s32.totalorder %s39, %s40
    %p54 = scmp.eq.s32.totalorder %s18, 1
    %p55 = por %p53, %p54
    %p57 = scmp.ne.s32.totalorder %s40, %s56
    %p58 = scmp.eq.s32.totalorder %s18, 0
    %p59 = por %p57, %p58
    %s60 = ssub.s32 %s20, %s27
    %p61 = scmp.eq.s32.totalorder %s60, 0
    %s63 = sadd.s32 %s62, 1
    %s64 = scalar_select %p61, %s62, %s63
    %p67 = pneg %p61
    %p68 = scmp.eq.s32.totalorder %s12, 1
    %p69 = por %p67, %p68
    %p70 = scmp.ne.s32.totalorder %s62, %s65
    %p71 = scmp.eq.s32.totalorder %s12, 0
    %p72 = por %p70, %p71
    %p73 = scmp.ne.s32.totalorder %s62, %s65
    %p74 = scmp.eq.s32.totalorder %s17, 1
    %p75 = por %p73, %p74
    %p76 = scmp.ne.s32.totalorder %s65, %s66
    %p77 = scmp.eq.s32.totalorder %s17, 0
    %p78 = por %p76, %p77
    %p79 = scmp.ne.s32.totalorder %s65, %s66
    %p80 = scmp.eq.s32.totalorder %s18, 1
    %p81 = por %p79, %p80
    %p83 = scmp.ne.s32.totalorder %s66, %s82
    %p84 = scmp.eq.s32.totalorder %s18, 0
    %p85 = por %p83, %p84
    %s87 = sadd.s32 %s86, 1
    %p90 = scmp.eq.s32.totalorder %s12, 1
    %p91 = scmp.ne.s32.totalorder %s86, %s88
    %p92 = scmp.eq.s32.totalorder %s12, 0
    %p93 = por %p91, %p92
    %p94 = scmp.ne.s32.totalorder %s86, %s88
    %p95 = scmp.eq.s32.totalorder %s17, 1
    %p96 = por %p94, %p95
    %p97 = scmp.ne.s32.totalorder %s88, %s89
    %p98 = scmp.eq.s32.totalorder %s17, 0
    %p99 = por %p97, %p98
    %p100 = scmp.ne.s32.totalorder %s88, %s89
    %p101 = scmp.eq.s32.totalorder %s18, 1
    %p102 = por %p100, %p101
    %p104 = scmp.ne.s32.totalorder %s89, %s103
    %p105 = scmp.eq.s32.totalorder %s18, 0
    %p106 = por %p104, %p105
    %s107 = ssub.s32 %s19, %s31
    %p108 = scmp.eq.s32.totalorder %s107, 0
    %s110 = sadd.s32 %s109, 1
    %s111 = scalar_select %p108, %s109, %s110
    %p114 = pneg %p108
    %p115 = scmp.eq.s32.totalorder %s12, 1
    %p116 = por %p114, %p115
    %p117 = scmp.ne.s32.totalorder %s109, %s112
    %p118 = scmp.eq.s32.totalorder %s12, 0
    %p119 = por %p117, %p118
    %p120 = scmp.ne.s32.totalorder %s109, %s112
    %p121 = scmp.eq.s32.totalorder %s17, 1
    %p122 = por %p120, %p121
    %p123 = scmp.ne.s32.totalorder %s112, %s113
    %p124 = scmp.eq.s32.totalorder %s17, 0
    %p125 = por %p123, %p124
    %p126 = scmp.ne.s32.totalorder %s112, %s113
    %p127 = scmp.eq.s32.totalorder %s18, 1
    %p128 = por %p126, %p127
    %p130 = scmp.ne.s32.totalorder %s113, %s129
    %p131 = scmp.eq.s32.totalorder %s18, 0
    %p132 = por %p130, %p131
    %s133 = ssub.s32 %s19, %s31
    %p134 = scmp.eq.s32.totalorder %s133, 0
    %s136 = sadd.s32 %s135, 1
    %s137 = scalar_select %p134, %s135, %s136
    %p140 = pneg %p134
    %p141 = scmp.eq.s32.totalorder %s12, 1
    %p142 = por %p140, %p141
    %p143 = scmp.ne.s32.totalorder %s135, %s138
    %p144 = scmp.eq.s32.totalorder %s12, 0
    %p145 = por %p143, %p144
    %p146 = scmp.ne.s32.totalorder %s135, %s138
    %p147 = scmp.eq.s32.totalorder %s17, 1
    %p148 = por %p146, %p147
    %p149 = scmp.ne.s32.totalorder %s138, %s139
    %p150 = scmp.eq.s32.totalorder %s17, 0
    %p151 = por %p149, %p150
    %p152 = scmp.ne.s32.totalorder %s138, %s139
    %p153 = scmp.eq.s32.totalorder %s18, 1
    %p154 = por %p152, %p153
    %p156 = scmp.ne.s32.totalorder %s139, %s155
    %p157 = scmp.eq.s32.totalorder %s18, 0
    %p158 = por %p156, %p157
    %s159 = ssub.s32 %s19, %s31
    %p160 = scmp.eq.s32.totalorder %s159, 0
    %s162 = sadd.s32 %s161, 1
    %s163 = scalar_select %p160, %s161, %s162
    %p166 = pneg %p160
    %p167 = scmp.eq.s32.totalorder %s12, 1
    %p168 = por %p166, %p167
    %p169 = scmp.ne.s32.totalorder %s161, %s164
    %p170 = scmp.eq.s32.totalorder %s12, 0
    %p171 = por %p169, %p170
    %p172 = scmp.ne.s32.totalorder %s161, %s164
    %p173 = scmp.eq.s32.totalorder %s17, 1
    %p174 = por %p172, %p173
    %p175 = scmp.ne.s32.totalorder %s164, %s165
    %p176 = scmp.eq.s32.totalorder %s17, 0
    %p177 = por %p175, %p176
    %p178 = scmp.ne.s32.totalorder %s164, %s165
    %p179 = scmp.eq.s32.totalorder %s18, 1
    %p180 = por %p178, %p179
    %p182 = scmp.ne.s32.totalorder %s165, %s181
    %p183 = scmp.eq.s32.totalorder %s18, 0
    %p184 = por %p182, %p183
    %p185 = scmp.le.s32.totalorder 1, %s12
    %p186 = scmp.lt.s32.totalorder %s12, 3
    %p187 = pnand %p185, %p186
    %p188 = pneg %p187
    // Predicated region
    $region9: #{unit_forward.2} parent=5 // pred_check
      _
    $region10: #{unit_forward.2} parent=5 // pred_check_branch
      %190 = sbr.rel (%p187) target = $region12
    $region11: #{unit_forward.2} parent=5 // pred_region
      %s191 = ssub.s32 %s12, 1
      // Predicated region
      $region13: #{unit_forward.2} parent=11 // pred_check
        %p192 = pneg %p78
      $region14: #{unit_forward.2} parent=11 // pred_check_branch
        %194 = sbr.rel (%p192) target = $region16
      $region15: #{unit_forward.2} parent=11 // pred_region
        %p195 = scmp.lt.s32.totalorder %s22, 0
        %s196 = scalar_select %p195, %s22, 0
        %s197 = smul.addr %s196, 8
        %s198 = scalar_lea.vmem %s1, %s197
      $region16: #{unit_forward.2} parent=11 // pred_fallthru
        _
      // Predicated region
      $region17: #{unit_forward.2} parent=11 // pred_check
        %p199 = pneg %p99
      $region18: #{unit_forward.2} parent=11 // pred_check_branch
        %201 = sbr.rel (%p199) target = $region20
      $region19: #{unit_forward.2} parent=11 // pred_region
        _
      $region20: #{unit_forward.2} parent=11 // pred_fallthru
        _
    $region12: #{unit_forward.2} parent=5 // pred_fallthru
      _
    %p202 = scmp.lt.s32.totalorder %s12, 2
    // Predicated region
    $region21: #{unit_forward.2} parent=5 // pred_check
      %p203 = pneg %p202
    $region22: #{unit_forward.2} parent=5 // pred_check_branch
      %205 = sbr.rel (%p203) target = $region24
    $region23: #{unit_forward.2} parent=5 // pred_region
      // Predicated region
      $region25: #{unit_forward.2} parent=23 // pred_check
        %p206 = pneg %p46
      $region26: #{unit_forward.2} parent=23 // pred_check_branch
        %208 = sbr.rel (%p206) target = $region28
      $region27: #{unit_forward.2} parent=23 // pred_region
        %p209 = scmp.lt.s32.totalorder %s19, 1
        %s210 = scalar_select %p209, %s19, 1
        %p211 = scmp.lt.s32.totalorder %s20, 0
        %s212 = scalar_select %p211, %s20, 0
        %s213 = smul.addr %s212, 3
        %s214 = smul.addr %s210, 3
        %s215 = sadd.s32 %s213, %s214
        %s216 = smul.addr %s215, 4
        %s217 = scalar_lea.vmem %s0, %s216
      $region28: #{unit_forward.2} parent=23 // pred_fallthru
        _
    $region24: #{unit_forward.2} parent=5 // pred_fallthru
      _
    %p218 = scmp.le.s32.totalorder 1, %s12
    %p219 = scmp.lt.s32.totalorder %s12, 3
    %p220 = pnand %p218, %p219
    %p221 = pneg %p220
    // Predicated region
    $region29: #{unit_forward.2} parent=5 // pred_check
      _
    $region30: #{unit_forward.2} parent=5 // pred_check_branch
      %223 = sbr.rel (%p220) target = $region32
    $region31: #{unit_forward.2} parent=5 // pred_region
      %s224 = ssub.s32 %s12, 1
      %p225 = scmp.lt.s32.totalorder %s21, 1
      %s226 = scalar_select %p225, %s21, 1
      %p227 = scmp.lt.s32.totalorder %s22, 0
      %s228 = scalar_select %p227, %s22, 0
      %s229 = smul.addr %s228, 3
      %s230 = smul.addr %s226, 3
      %s231 = sadd.s32 %s229, %s230
      %s232 = smul.addr %s231, 4
      %s233 = scalar_lea.vmem %s0, %s232
      %p234 = pneg %p52
      %p235 = pneg %p49
      %p236 = scmp.lt.s32.totalorder %s22, 0
      %s237 = scalar_select %p236, %s22, 0
      %s238 = smul.addr %s237, 8
      %s239 = scalar_lea.vmem %s1, %s238
      %p240 = pneg %p78
      %p241 = pneg %p75
      %p242 = pneg %p99
      %p243 = pneg %p96
      %p244 = pneg %p125
      %p245 = pneg %p122
      %p246 = scmp.lt.s32.totalorder %s21, 1
      %s247 = scalar_select %p246, %s21, 1
      %s248 = smul.addr %s247, 3
      %s249 = smul.addr %s248, 8
      %s250 = scalar_lea.vmem %s3, %s249
      %p251 = pneg %p151
      %p252 = pneg %p148
      %p253 = scmp.lt.s32.totalorder %s21, 1
      %s254 = scalar_select %p253, %s21, 1
      %s255 = smul.addr %s254, 8
      %s256 = scalar_lea.vmem %s4, %s255
      %p257 = pneg %p177
      %p258 = pneg %p174
      %p259 = scmp.lt.s32.totalorder %s21, 1
      %s260 = scalar_select %p259, %s21, 1
      %s261 = smul.addr %s260, 8
      %s262 = scalar_lea.vmem %s5, %s261
      %p263 = scmp.lt.s32.totalorder %s21, 1
      %s264 = scalar_select %p263, %s21, 1
      %p265 = scmp.lt.s32.totalorder %s22, 0
      %s266 = scalar_select %p265, %s22, 0
      %s267 = smul.addr %s266, 3
      %s268 = smul.addr %s264, 3
      %s269 = sadd.s32 %s267, %s268
      %s270 = smul.addr %s269, 4
      %s271 = scalar_lea.vmem %s0, %s270
      %p272 = scmp.lt.s32.totalorder %s22, 0
      %s273 = scalar_select %p272, %s22, 0
      %s274 = smul.addr %s273, 8
      %s275 = scalar_lea.vmem %s1, %s274
      %p276 = scmp.lt.s32.totalorder %s21, 1
      %s277 = scalar_select %p276, %s21, 1
      %s278 = smul.addr %s277, 3
      %s279 = smul.addr %s278, 8
      %s280 = scalar_lea.vmem %s3, %s279
      %p281 = scmp.lt.s32.totalorder %s21, 1
      %s282 = scalar_select %p281, %s21, 1
      %s283 = smul.addr %s282, 8
      %s284 = scalar_lea.vmem %s4, %s283
      %p285 = scmp.lt.s32.totalorder %s21, 1
      %s286 = scalar_select %p285, %s21, 1
      %s287 = smul.addr %s286, 8
      %s288 = scalar_lea.vmem %s5, %s287
      %v289 = vld [vmem:[%s271] sm:$0xff]
      %v290 = vld [vmem:[%s271 + $0x8] sm:$0xf]
      %v293 = vrot.slane %v289, 3
      %v294 = vrot.slane %v290, 6
      %v295 = vrot.slane %v290, 1
      %vm296 = vcmask 1040384
      %v297 = vsel %vm296, %v289, %v293
      %vm298 = vcmask 1042434
      %v299 = vsel %vm298, %v294, %v295
      %vm300 = vcmask 1041408
      %v301 = vsel %vm300, %v297, %v299
      %vm302 = vcmask 1041409
      %v303 = vsel %vm302, %v289, %v293
      %vm304 = vcmask 1043459
      %v305 = vsel %vm304, %v294, %v295
      %vm306 = vcmask 1042433
      %v307 = vsel %vm306, %v303, %v305
      %v308 = vrot.slane %v307, 1
      %v309 = vsel %vm298, %v289, %v293
      %vm310 = vcmask 1044484
      %v311 = vsel %vm310, %v294, %v295
      %vm312 = vcmask 1043458
      %v313 = vsel %vm312, %v309, %v311
      %v314 = vrot.slane %v313, 2
      %v315 = vsel %vm304, %v289, %v293
      %vm316 = vcmask 1045509
      %v317 = vsel %vm316, %v294, %v295
      %vm318 = vcmask 1044483
      %v319 = vsel %vm318, %v315, %v317
      %v320 = vrot.slane %v319, 3
      %v321 = vperm.slane %v301, 0
      %v322 = vperm.slane %v301, 1
      %v323 = vperm.slane %v301, 2
      %v324 = vperm.slane %v308, 0
      %v325 = vperm.slane %v308, 1
      %v326 = vperm.slane %v308, 2
      %v327 = vperm.slane %v314, 0
      %v328 = vperm.slane %v314, 1
      %v329 = vperm.slane %v314, 2
      %v330 = vperm.slane %v320, 0
      %v331 = vperm.slane %v320, 1
      %v332 = vperm.slane %v320, 2
      %345 = vrot.lane.b32.xlu0 %v321, 127
      %v346 = vpop.permute.xlu0 %345
      %347 = vrot.lane.b32.xlu0 %v322, 127
      %v348 = vpop.permute.xlu0 %347
      %349 = vrot.lane.b32.xlu0 %v323, 127
      %v350 = vpop.permute.xlu0 %349
      %351 = vrot.lane.b32.xlu0 %v324, 127
      %v352 = vpop.permute.xlu0 %351
      %353 = vrot.lane.b32.xlu0 %v325, 127
      %v354 = vpop.permute.xlu0 %353
      %355 = vrot.lane.b32.xlu0 %v326, 127
      %v356 = vpop.permute.xlu0 %355
      %357 = vrot.lane.b32.xlu0 %v327, 127
      %v358 = vpop.permute.xlu0 %357
      %359 = vrot.lane.b32.xlu0 %v328, 127
      %v360 = vpop.permute.xlu0 %359
      %361 = vrot.lane.b32.xlu0 %v329, 127
      %v362 = vpop.permute.xlu0 %361
      %363 = vrot.lane.b32.xlu0 %v330, 127
      %v364 = vpop.permute.xlu0 %363
      %365 = vrot.lane.b32.xlu0 %v331, 127
      %v366 = vpop.permute.xlu0 %365
      %367 = vrot.lane.b32.xlu0 %v332, 127
      %v368 = vpop.permute.xlu0 %367
      %vm369 = vcmask 1039360
      %v370 = vsel %vm369, %v346, %v348
      %v371 = vsel %vm369, %v348, %v350
      %v372 = vsel %vm369, %v352, %v354
      %v373 = vsel %vm369, %v354, %v356
      %v374 = vsel %vm369, %v358, %v360
      %v375 = vsel %vm369, %v360, %v362
      %v376 = vsel %vm369, %v364, %v366
      %v377 = vsel %vm369, %v366, %v368
      %390 = vrot.lane.b32.xlu0 %v321, 126
      %v391 = vpop.permute.xlu0 %390
      %392 = vrot.lane.b32.xlu0 %v322, 126
      %v393 = vpop.permute.xlu0 %392
      %394 = vrot.lane.b32.xlu0 %v323, 126
      %v395 = vpop.permute.xlu0 %394
      %396 = vrot.lane.b32.xlu0 %v324, 126
      %v397 = vpop.permute.xlu0 %396
      %398 = vrot.lane.b32.xlu0 %v325, 126
      %v399 = vpop.permute.xlu0 %398
      %400 = vrot.lane.b32.xlu0 %v326, 126
      %v401 = vpop.permute.xlu0 %400
      %402 = vrot.lane.b32.xlu0 %v327, 126
      %v403 = vpop.permute.xlu0 %402
      %404 = vrot.lane.b32.xlu0 %v328, 126
      %v405 = vpop.permute.xlu0 %404
      %406 = vrot.lane.b32.xlu0 %v329, 126
      %v407 = vpop.permute.xlu0 %406
      %408 = vrot.lane.b32.xlu0 %v330, 126
      %v409 = vpop.permute.xlu0 %408
      %410 = vrot.lane.b32.xlu0 %v331, 126
      %v411 = vpop.permute.xlu0 %410
      %412 = vrot.lane.b32.xlu0 %v332, 126
      %v413 = vpop.permute.xlu0 %412
      %vm414 = vcmask 1031168
      %v415 = vsel %vm414, %v391, %v393
      %v416 = vsel %vm414, %v393, %v395
      %v417 = vsel %vm414, %v397, %v399
      %v418 = vsel %vm414, %v399, %v401
      %v419 = vsel %vm414, %v403, %v405
      %v420 = vsel %vm414, %v405, %v407
      %v421 = vsel %vm414, %v409, %v411
      %v422 = vsel %vm414, %v411, %v413
      %435 = vrot.lane.b32.xlu0 %v321, 110
      %v436 = vpop.permute.xlu0 %435
      %437 = vrot.lane.b32.xlu0 %v322, 110
      %v438 = vpop.permute.xlu0 %437
      %439 = vrot.lane.b32.xlu0 %v323, 110
      %v440 = vpop.permute.xlu0 %439
      %441 = vrot.lane.b32.xlu0 %v324, 110
      %v442 = vpop.permute.xlu0 %441
      %443 = vrot.lane.b32.xlu0 %v325, 110
      %v444 = vpop.permute.xlu0 %443
      %445 = vrot.lane.b32.xlu0 %v326, 110
      %v446 = vpop.permute.xlu0 %445
      %447 = vrot.lane.b32.xlu0 %v327, 110
      %v448 = vpop.permute.xlu0 %447
      %449 = vrot.lane.b32.xlu0 %v328, 110
      %v450 = vpop.permute.xlu0 %449
      %451 = vrot.lane.b32.xlu0 %v329, 110
      %v452 = vpop.permute.xlu0 %451
      %453 = vrot.lane.b32.xlu0 %v330, 110
      %v454 = vpop.permute.xlu0 %453
      %455 = vrot.lane.b32.xlu0 %v331, 110
      %v456 = vpop.permute.xlu0 %455
      %457 = vrot.lane.b32.xlu0 %v332, 110
      %v458 = vpop.permute.xlu0 %457
      %vm459 = vcmask 900096
      %v460 = vsel %vm459, %v436, %v438
      %v461 = vsel %vm459, %v438, %v440
      %v462 = vsel %vm459, %v442, %v444
      %v463 = vsel %vm459, %v444, %v446
      %v464 = vsel %vm459, %v448, %v450
      %v465 = vsel %vm459, %v450, %v452
      %v466 = vsel %vm459, %v454, %v456
      %v467 = vsel %vm459, %v456, %v458
      %480 = vrot.lane.b32.xlu0 %v321, 109
      %v481 = vpop.permute.xlu0 %480
      %482 = vrot.lane.b32.xlu0 %v322, 109
      %v483 = vpop.permute.xlu0 %482
      %484 = vrot.lane.b32.xlu0 %v323, 109
      %v485 = vpop.permute.xlu0 %484
      %486 = vrot.lane.b32.xlu0 %v324, 109
      %v487 = vpop.permute.xlu0 %486
      %488 = vrot.lane.b32.xlu0 %v325, 109
      %v489 = vpop.permute.xlu0 %488
      %490 = vrot.lane.b32.xlu0 %v326, 109
      %v491 = vpop.permute.xlu0 %490
      %492 = vrot.lane.b32.xlu0 %v327, 109
      %v493 = vpop.permute.xlu0 %492
      %494 = vrot.lane.b32.xlu0 %v328, 109
      %v495 = vpop.permute.xlu0 %494
      %496 = vrot.lane.b32.xlu0 %v329, 109
      %v497 = vpop.permute.xlu0 %496
      %498 = vrot.lane.b32.xlu0 %v330, 109
      %v499 = vpop.permute.xlu0 %498
      %500 = vrot.lane.b32.xlu0 %v331, 109
      %v501 = vpop.permute.xlu0 %500
      %502 = vrot.lane.b32.xlu0 %v332, 109
      %v503 = vpop.permute.xlu0 %502
      %vm504 = vcmask 891904
      %v505 = vsel %vm504, %v481, %v483
      %v506 = vsel %vm504, %v483, %v485
      %v507 = vsel %vm504, %v487, %v489
      %v508 = vsel %vm504, %v489, %v491
      %v509 = vsel %vm504, %v493, %v495
      %v510 = vsel %vm504, %v495, %v497
      %v511 = vsel %vm504, %v499, %v501
      %v512 = vsel %vm504, %v501, %v503
      %525 = vrot.lane.b32.xlu0 %v321, 108
      %v526 = vpop.permute.xlu0 %525
      %527 = vrot.lane.b32.xlu0 %v322, 108
      %v528 = vpop.permute.xlu0 %527
      %529 = vrot.lane.b32.xlu0 %v323, 108
      %v530 = vpop.permute.xlu0 %529
      %531 = vrot.lane.b32.xlu0 %v324, 108
      %v532 = vpop.permute.xlu0 %531
      %533 = vrot.lane.b32.xlu0 %v325, 108
      %v534 = vpop.permute.xlu0 %533
      %535 = vrot.lane.b32.xlu0 %v326, 108
      %v536 = vpop.permute.xlu0 %535
      %537 = vrot.lane.b32.xlu0 %v327, 108
      %v538 = vpop.permute.xlu0 %537
      %539 = vrot.lane.b32.xlu0 %v328, 108
      %v540 = vpop.permute.xlu0 %539
      %541 = vrot.lane.b32.xlu0 %v329, 108
      %v542 = vpop.permute.xlu0 %541
      %543 = vrot.lane.b32.xlu0 %v330, 108
      %v544 = vpop.permute.xlu0 %543
      %545 = vrot.lane.b32.xlu0 %v331, 108
      %v546 = vpop.permute.xlu0 %545
      %547 = vrot.lane.b32.xlu0 %v332, 108
      %v548 = vpop.permute.xlu0 %547
      %vm549 = vcmask 883712
      %v550 = vsel %vm549, %v526, %v528
      %v551 = vsel %vm549, %v528, %v530
      %v552 = vsel %vm549, %v532, %v534
      %v553 = vsel %vm549, %v534, %v536
      %v554 = vsel %vm549, %v538, %v540
      %v555 = vsel %vm549, %v540, %v542
      %v556 = vsel %vm549, %v544, %v546
      %v557 = vsel %vm549, %v546, %v548
      %570 = vrot.lane.b32.xlu0 %v321, 92
      %v571 = vpop.permute.xlu0 %570
      %572 = vrot.lane.b32.xlu0 %v322, 92
      %v573 = vpop.permute.xlu0 %572
      %574 = vrot.lane.b32.xlu0 %v323, 92
      %v575 = vpop.permute.xlu0 %574
      %576 = vrot.lane.b32.xlu0 %v324, 92
      %v577 = vpop.permute.xlu0 %576
      %578 = vrot.lane.b32.xlu0 %v325, 92
      %v579 = vpop.permute.xlu0 %578
      %580 = vrot.lane.b32.xlu0 %v326, 92
      %v581 = vpop.permute.xlu0 %580
      %582 = vrot.lane.b32.xlu0 %v327, 92
      %v583 = vpop.permute.xlu0 %582
      %584 = vrot.lane.b32.xlu0 %v328, 92
      %v585 = vpop.permute.xlu0 %584
      %586 = vrot.lane.b32.xlu0 %v329, 92
      %v587 = vpop.permute.xlu0 %586
      %588 = vrot.lane.b32.xlu0 %v330, 92
      %v589 = vpop.permute.xlu0 %588
      %590 = vrot.lane.b32.xlu0 %v331, 92
      %v591 = vpop.permute.xlu0 %590
      %592 = vrot.lane.b32.xlu0 %v332, 92
      %v593 = vpop.permute.xlu0 %592
      %vm594 = vcmask 752640
      %v595 = vsel %vm594, %v571, %v573
      %v596 = vsel %vm594, %v573, %v575
      %v597 = vsel %vm594, %v577, %v579
      %v598 = vsel %vm594, %v579, %v581
      %v599 = vsel %vm594, %v583, %v585
      %v600 = vsel %vm594, %v585, %v587
      %v601 = vsel %vm594, %v589, %v591
      %v602 = vsel %vm594, %v591, %v593
      %615 = vrot.lane.b32.xlu0 %v321, 91
      %v616 = vpop.permute.xlu0 %615
      %617 = vrot.lane.b32.xlu0 %v322, 91
      %v618 = vpop.permute.xlu0 %617
      %619 = vrot.lane.b32.xlu0 %v323, 91
      %v620 = vpop.permute.xlu0 %619
      %621 = vrot.lane.b32.xlu0 %v324, 91
      %v622 = vpop.permute.xlu0 %621
      %623 = vrot.lane.b32.xlu0 %v325, 91
      %v624 = vpop.permute.xlu0 %623
      %625 = vrot.lane.b32.xlu0 %v326, 91
      %v626 = vpop.permute.xlu0 %625
      %627 = vrot.lane.b32.xlu0 %v327, 91
      %v628 = vpop.permute.xlu0 %627
      %629 = vrot.lane.b32.xlu0 %v328, 91
      %v630 = vpop.permute.xlu0 %629
      %631 = vrot.lane.b32.xlu0 %v329, 91
      %v632 = vpop.permute.xlu0 %631
      %633 = vrot.lane.b32.xlu0 %v330, 91
      %v634 = vpop.permute.xlu0 %633
      %635 = vrot.lane.b32.xlu0 %v331, 91
      %v636 = vpop.permute.xlu0 %635
      %637 = vrot.lane.b32.xlu0 %v332, 91
      %v638 = vpop.permute.xlu0 %637
      %vm639 = vcmask 744448
      %v640 = vsel %vm639, %v616, %v618
      %v641 = vsel %vm639, %v618, %v620
      %v642 = vsel %vm639, %v622, %v624
      %v643 = vsel %vm639, %v624, %v626
      %v644 = vsel %vm639, %v628, %v630
      %v645 = vsel %vm639, %v630, %v632
      %v646 = vsel %vm639, %v634, %v636
      %v647 = vsel %vm639, %v636, %v638
      %660 = vrot.lane.b32.xlu0 %v321, 90
      %v661 = vpop.permute.xlu0 %660
      %662 = vrot.lane.b32.xlu0 %v322, 90
      %v663 = vpop.permute.xlu0 %662
      %664 = vrot.lane.b32.xlu0 %v323, 90
      %v665 = vpop.permute.xlu0 %664
      %666 = vrot.lane.b32.xlu0 %v324, 90
      %v667 = vpop.permute.xlu0 %666
      %668 = vrot.lane.b32.xlu0 %v325, 90
      %v669 = vpop.permute.xlu0 %668
      %670 = vrot.lane.b32.xlu0 %v326, 90
      %v671 = vpop.permute.xlu0 %670
      %672 = vrot.lane.b32.xlu0 %v327, 90
      %v673 = vpop.permute.xlu0 %672
      %674 = vrot.lane.b32.xlu0 %v328, 90
      %v675 = vpop.permute.xlu0 %674
      %676 = vrot.lane.b32.xlu0 %v329, 90
      %v677 = vpop.permute.xlu0 %676
      %678 = vrot.lane.b32.xlu0 %v330, 90
      %v679 = vpop.permute.xlu0 %678
      %680 = vrot.lane.b32.xlu0 %v331, 90
      %v681 = vpop.permute.xlu0 %680
      %682 = vrot.lane.b32.xlu0 %v332, 90
      %v683 = vpop.permute.xlu0 %682
      %vm684 = vcmask 736256
      %v685 = vsel %vm684, %v661, %v663
      %v686 = vsel %vm684, %v663, %v665
      %v687 = vsel %vm684, %v667, %v669
      %v688 = vsel %vm684, %v669, %v671
      %v689 = vsel %vm684, %v673, %v675
      %v690 = vsel %vm684, %v675, %v677
      %v691 = vsel %vm684, %v679, %v681
      %v692 = vsel %vm684, %v681, %v683
      %v693 = vsel %vm296, %v321, %v370
      %v694 = vsel %vm296, %v322, %v371
      %v695 = vsel %vm296, %v323, %v350
      %v696 = vsel %vm296, %v324, %v372
      %v697 = vsel %vm296, %v325, %v373
      %v698 = vsel %vm296, %v326, %v356
      %v699 = vsel %vm296, %v327, %v374
      %v700 = vsel %vm296, %v328, %v375
      %v701 = vsel %vm296, %v329, %v362
      %v702 = vsel %vm296, %v330, %v376
      %v703 = vsel %vm296, %v331, %v377
      %v704 = vsel %vm296, %v332, %v368
      %v705 = vsel %vm300, %v693, %v415
      %v706 = vsel %vm300, %v694, %v416
      %v707 = vsel %vm300, %v695, %v395
      %v708 = vsel %vm300, %v696, %v417
      %v709 = vsel %vm300, %v697, %v418
      %v710 = vsel %vm300, %v698, %v401
      %v711 = vsel %vm300, %v699, %v419
      %v712 = vsel %vm300, %v700, %v420
      %v713 = vsel %vm300, %v701, %v407
      %v714 = vsel %vm300, %v702, %v421
      %v715 = vsel %vm300, %v703, %v422
      %v716 = vsel %vm300, %v704, %v413
      %vm717 = vcmask 1042432
      %v718 = vsel %vm717, %v705, %v460
      %v719 = vsel %vm717, %v706, %v461
      %v720 = vsel %vm717, %v707, %v440
      %v721 = vsel %vm717, %v708, %v462
      %v722 = vsel %vm717, %v709, %v463
      %v723 = vsel %vm717, %v710, %v446
      %v724 = vsel %vm717, %v711, %v464
      %v725 = vsel %vm717, %v712, %v465
      %v726 = vsel %vm717, %v713, %v452
      %v727 = vsel %vm717, %v714, %v466
      %v728 = vsel %vm717, %v715, %v467
      %v729 = vsel %vm717, %v716, %v458
      %vm730 = vcmask 1043456
      %v731 = vsel %vm730, %v718, %v505
      %v732 = vsel %vm730, %v719, %v506
      %v733 = vsel %vm730, %v720, %v485
      %v734 = vsel %vm730, %v721, %v507
      %v735 = vsel %vm730, %v722, %v508
      %v736 = vsel %vm730, %v723, %v491
      %v737 = vsel %vm730, %v724, %v509
      %v738 = vsel %vm730, %v725, %v510
      %v739 = vsel %vm730, %v726, %v497
      %v740 = vsel %vm730, %v727, %v511
      %v741 = vsel %vm730, %v728, %v512
      %v742 = vsel %vm730, %v729, %v503
      %vm743 = vcmask 1044480
      %v744 = vsel %vm743, %v731, %v550
      %v745 = vsel %vm743, %v732, %v551
      %v746 = vsel %vm743, %v733, %v530
      %v747 = vsel %vm743, %v734, %v552
      %v748 = vsel %vm743, %v735, %v553
      %v749 = vsel %vm743, %v736, %v536
      %v750 = vsel %vm743, %v737, %v554
      %v751 = vsel %vm743, %v738, %v555
      %v752 = vsel %vm743, %v739, %v542
      %v753 = vsel %vm743, %v740, %v556
      %v754 = vsel %vm743, %v741, %v557
      %v755 = vsel %vm743, %v742, %v548
      %vm756 = vcmask 1045504
      %v757 = vsel %vm756, %v744, %v595
      %v758 = vsel %vm756, %v745, %v596
      %v759 = vsel %vm756, %v746, %v575
      %v760 = vsel %vm756, %v747, %v597
      %v761 = vsel %vm756, %v748, %v598
      %v762 = vsel %vm756, %v749, %v581
      %v763 = vsel %vm756, %v750, %v599
      %v764 = vsel %vm756, %v751, %v600
      %v765 = vsel %vm756, %v752, %v587
      %v766 = vsel %vm756, %v753, %v601
      %v767 = vsel %vm756, %v754, %v602
      %v768 = vsel %vm756, %v755, %v593
      %vm769 = vcmask 1046528
      %v770 = vsel %vm769, %v757, %v640
      %v771 = vsel %vm769, %v758, %v641
      %v772 = vsel %vm769, %v759, %v620
      %v773 = vsel %vm769, %v760, %v642
      %v774 = vsel %vm769, %v761, %v643
      %v775 = vsel %vm769, %v762, %v626
      %v776 = vsel %vm769, %v763, %v644
      %v777 = vsel %vm769, %v764, %v645
      %v778 = vsel %vm769, %v765, %v632
      %v779 = vsel %vm769, %v766, %v646
      %v780 = vsel %vm769, %v767, %v647
      %v781 = vsel %vm769, %v768, %v638
      %v794 = vrot.slane %v771, 7
      %v795 = vrot.slane %v772, 6
      %v796 = vrot.slane %v686, 7
      %v797 = vrot.slane %v665, 6
      %v798 = vrot.slane %v774, 7
      %v799 = vrot.slane %v775, 6
      %v800 = vrot.slane %v688, 7
      %v801 = vrot.slane %v671, 6
      %v802 = vrot.slane %v777, 7
      %v803 = vrot.slane %v778, 6
      %v804 = vrot.slane %v690, 7
      %v805 = vrot.slane %v677, 6
      %v806 = vrot.slane %v780, 7
      %v807 = vrot.slane %v781, 6
      %v808 = vrot.slane %v692, 7
      %v809 = vrot.slane %v683, 6
      %v810 = vsel %vm296, %v770, %v794
      %v811 = vsel %vm300, %v810, %v795
      %v812 = vsel %vm302, %v770, %v794
      %v813 = vsel %vm306, %v812, %v795
      %v814 = vrot.slane %v813, 1
      %v815 = vsel %vm298, %v770, %v794
      %v816 = vsel %vm312, %v815, %v795
      %v817 = vrot.slane %v816, 2
      %v818 = vsel %vm304, %v770, %v794
      %v819 = vsel %vm318, %v818, %v795
      %v820 = vrot.slane %v819, 3
      %v821 = vsel %vm310, %v770, %v794
      %vm822 = vcmask 1045508
      %v823 = vsel %vm822, %v821, %v795
      %v824 = vrot.slane %v823, 4
      %v825 = vsel %vm316, %v770, %v794
      %vm826 = vcmask 1046533
      %v827 = vsel %vm826, %v825, %v795
      %v828 = vrot.slane %v827, 5
      %vm829 = vcmask 1046534
      %v830 = vsel %vm829, %v770, %v794
      %v831 = vsel %vm756, %v795, %v830
      %v832 = vrot.slane %v831, 6
      %v833 = vsel %vm769, %v794, %v770
      %vm834 = vcmask 1046529
      %v835 = vsel %vm834, %v795, %v833
      %v836 = vrot.slane %v835, 7
      %v837 = vsel %vm296, %v685, %v796
      %v838 = vsel %vm300, %v837, %v797
      %v839 = vsel %vm296, %v773, %v798
      %v840 = vsel %vm300, %v839, %v799
      %v841 = vsel %vm302, %v773, %v798
      %v842 = vsel %vm306, %v841, %v799
      %v843 = vrot.slane %v842, 1
      %v844 = vsel %vm298, %v773, %v798
      %v845 = vsel %vm312, %v844, %v799
      %v846 = vrot.slane %v845, 2
      %v847 = vsel %vm304, %v773, %v798
      %v848 = vsel %vm318, %v847, %v799
      %v849 = vrot.slane %v848, 3
      %v850 = vsel %vm310, %v773, %v798
      %v851 = vsel %vm822, %v850, %v799
      %v852 = vrot.slane %v851, 4
      %v853 = vsel %vm316, %v773, %v798
      %v854 = vsel %vm826, %v853, %v799
      %v855 = vrot.slane %v854, 5
      %v856 = vsel %vm829, %v773, %v798
      %v857 = vsel %vm756, %v799, %v856
      %v858 = vrot.slane %v857, 6
      %v859 = vsel %vm769, %v798, %v773
      %v860 = vsel %vm834, %v799, %v859
      %v861 = vrot.slane %v860, 7
      %v862 = vsel %vm296, %v687, %v800
      %v863 = vsel %vm300, %v862, %v801
      %v864 = vsel %vm296, %v776, %v802
      %v865 = vsel %vm300, %v864, %v803
      %v866 = vsel %vm302, %v776, %v802
      %v867 = vsel %vm306, %v866, %v803
      %v868 = vrot.slane %v867, 1
      %v869 = vsel %vm298, %v776, %v802
      %v870 = vsel %vm312, %v869, %v803
      %v871 = vrot.slane %v870, 2
      %v872 = vsel %vm304, %v776, %v802
      %v873 = vsel %vm318, %v872, %v803
      %v874 = vrot.slane %v873, 3
      %v875 = vsel %vm310, %v776, %v802
      %v876 = vsel %vm822, %v875, %v803
      %v877 = vrot.slane %v876, 4
      %v878 = vsel %vm316, %v776, %v802
      %v879 = vsel %vm826, %v878, %v803
      %v880 = vrot.slane %v879, 5
      %v881 = vsel %vm829, %v776, %v802
      %v882 = vsel %vm756, %v803, %v881
      %v883 = vrot.slane %v882, 6
      %v884 = vsel %vm769, %v802, %v776
      %v885 = vsel %vm834, %v803, %v884
      %v886 = vrot.slane %v885, 7
      %v887 = vsel %vm296, %v689, %v804
      %v888 = vsel %vm300, %v887, %v805
      %v889 = vsel %vm296, %v779, %v806
      %v890 = vsel %vm300, %v889, %v807
      %v891 = vsel %vm302, %v779, %v806
      %v892 = vsel %vm306, %v891, %v807
      %v893 = vrot.slane %v892, 1
      %v894 = vsel %vm298, %v779, %v806
      %v895 = vsel %vm312, %v894, %v807
      %v896 = vrot.slane %v895, 2
      %v897 = vsel %vm304, %v779, %v806
      %v898 = vsel %vm318, %v897, %v807
      %v899 = vrot.slane %v898, 3
      %v900 = vsel %vm310, %v779, %v806
      %v901 = vsel %vm822, %v900, %v807
      %v902 = vrot.slane %v901, 4
      %v903 = vsel %vm316, %v779, %v806
      %v904 = vsel %vm826, %v903, %v807
      %v905 = vrot.slane %v904, 5
      %v906 = vsel %vm829, %v779, %v806
      %v907 = vsel %vm756, %v807, %v906
      %v908 = vrot.slane %v907, 6
      %v909 = vsel %vm769, %v806, %v779
      %v910 = vsel %vm834, %v807, %v909
      %v911 = vrot.slane %v910, 7
      %v912 = vsel %vm296, %v691, %v808
      %v913 = vsel %vm300, %v912, %v809
      %v914 = vld [vmem:[%s275] sm:$0xff]
      %915 = vst [vmem:[#allocation1] ss:$9 sm:$0xff] %v811
      %s916 = scalar_lea.vmem [#allocation1], 1
      %917 = vst [vmem:[%s916] ss:$9 sm:$0xff] %v814
      %s918 = scalar_lea.vmem [#allocation1], 2
      %919 = vst [vmem:[%s918] ss:$9 sm:$0xff] %v817
      %s920 = scalar_lea.vmem [#allocation1], 3
      %921 = vst [vmem:[%s920] ss:$9 sm:$0xff] %v820
      %s922 = scalar_lea.vmem [#allocation1], 4
      %923 = vst [vmem:[%s922] ss:$9 sm:$0xff] %v824
      %s924 = scalar_lea.vmem [#allocation1], 5
      %925 = vst [vmem:[%s924] ss:$9 sm:$0xff] %v828
      %s926 = scalar_lea.vmem [#allocation1], 6
      %927 = vst [vmem:[%s926] ss:$9 sm:$0xff] %v832
      %s928 = scalar_lea.vmem [#allocation1], 7
      %929 = vst [vmem:[%s928] ss:$9 sm:$0xff] %v836
      %v930 = vld [vmem:[#allocation1] sm:$0xff]
      %v931 = vld [vmem:[#allocation1 + $0x9] sm:$0xff]
      %v932 = vld [vmem:[#allocation1 + $0x12] sm:$0xff]
      %933 = vst [vmem:[#allocation1] ss:$9 sm:$0xff] %v838
      %934 = vst [vmem:[%s916] ss:$9 sm:$0xff] %v840
      %935 = vst [vmem:[%s918] ss:$9 sm:$0xff] %v843
      %936 = vst [vmem:[%s920] ss:$9 sm:$0xff] %v846
      %937 = vst [vmem:[%s922] ss:$9 sm:$0xff] %v849
      %938 = vst [vmem:[%s924] ss:$9 sm:$0xff] %v852
      %939 = vst [vmem:[%s926] ss:$9 sm:$0xff] %v855
      %940 = vst [vmem:[%s928] ss:$9 sm:$0xff] %v858
      %v941 = vld [vmem:[#allocation1] sm:$0xff]
      %v942 = vld [vmem:[#allocation1 + $0x9] sm:$0xff]
      %v943 = vld [vmem:[#allocation1 + $0x12] sm:$0xff]
      %944 = vst [vmem:[#allocation1] ss:$9 sm:$0xff] %v861
      %945 = vst [vmem:[%s916] ss:$9 sm:$0xff] %v863
      %946 = vst [vmem:[%s918] ss:$9 sm:$0xff] %v865
      %947 = vst [vmem:[%s920] ss:$9 sm:$0xff] %v868
      %948 = vst [vmem:[%s922] ss:$9 sm:$0xff] %v871
      %949 = vst [vmem:[%s924] ss:$9 sm:$0xff] %v874
      %950 = vst [vmem:[%s926] ss:$9 sm:$0xff] %v877
      %951 = vst [vmem:[%s928] ss:$9 sm:$0xff] %v880
      %v952 = vld [vmem:[#allocation1] sm:$0xff]
      %v953 = vld [vmem:[#allocation1 + $0x9] sm:$0xff]
      %v954 = vld [vmem:[#allocation1 + $0x12] sm:$0xff]
      %955 = vst [vmem:[#allocation1] ss:$9 sm:$0xff] %v883
      %956 = vst [vmem:[%s916] ss:$9 sm:$0xff] %v886
      %957 = vst [vmem:[%s918] ss:$9 sm:$0xff] %v888
      %958 = vst [vmem:[%s920] ss:$9 sm:$0xff] %v890
      %959 = vst [vmem:[%s922] ss:$9 sm:$0xff] %v893
      %960 = vst [vmem:[%s924] ss:$9 sm:$0xff] %v896
      %961 = vst [vmem:[%s926] ss:$9 sm:$0xff] %v899
      %962 = vst [vmem:[%s928] ss:$9 sm:$0xff] %v902
      %v963 = vld [vmem:[#allocation1] sm:$0xff]
      %v964 = vld [vmem:[#allocation1 + $0x9] sm:$0xff]
      %v965 = vld [vmem:[#allocation1 + $0x12] sm:$0xff]
      %966 = vst [vmem:[#allocation1] ss:$9 sm:$0xff] %v905
      %967 = vst [vmem:[%s916] ss:$9 sm:$0xff] %v908
      %968 = vst [vmem:[%s918] ss:$9 sm:$0xff] %v911
      %969 = vst [vmem:[%s920] ss:$9 sm:$0xff] %v913
      %v970 = vld [vmem:[#allocation1] sm:$0xff]
      %v971 = vld [vmem:[#allocation1 + $0x9] sm:$0xff]
      %v972 = vld [vmem:[#allocation1 + $0x12] sm:$0xff]
      %vm985 = vcmask 293888
      %v987 = vsel %vm985, %v914, 0
      %v989 = vsel %vm730, %v970, 0
      %v991 = vsel %vm730, %v971, 0
      %v993 = vsel %vm730, %v972, 0
      %995 = vmatpush.msra.mxu0 0.0
      %996 = vmatpush.msra.mxu0 0.0
      %997 = vmatpush.msra.mxu0 0.0
      %998 = vmatpush.msra.mxu0 0.0
      %999 = vmatpush.msra.mxu0 0.0
      %1000 = vmatpush.msra.mxu0 0.0
      %1001 = vmatpush.msra.mxu0 0.0
      %1002 = vmatpush.msra.mxu0 0.0
      %1003 = vmatpush.msra.mxu0 0.0
      %1004 = vmatpush.msra.mxu0 0.0
      %1005 = vmatpush.msra.mxu0 0.0
      %1006 = vmatpush.msra.mxu0 %v989
      %1007 = vmatpush.msra.mxu0 %v963
      %1008 = vmatpush.msra.mxu0 %v952
      %1009 = vmatpush.msra.mxu0 %v941
      %1010 = vmatpush.msra.mxu0 %v930
      %1011 = vmatmul.f32.gmra.mxu0 %v987
      %v1012 = vpop.f32.mrf.mxu0
      %v1013 = vadd.f32 0.0, %v1012
      %1014 = vdwg.mxu0
      %1015 = vmatpush.msra.mxu0 0.0
      %1016 = vmatpush.msra.mxu0 0.0
      %1017 = vmatpush.msra.mxu0 0.0
      %1018 = vmatpush.msra.mxu0 0.0
      %1019 = vmatpush.msra.mxu0 0.0
      %1020 = vmatpush.msra.mxu0 0.0
      %1021 = vmatpush.msra.mxu0 0.0
      %1022 = vmatpush.msra.mxu0 0.0
      %1023 = vmatpush.msra.mxu0 0.0
      %1024 = vmatpush.msra.mxu0 0.0
      %1025 = vmatpush.msra.mxu0 0.0
      %1026 = vmatpush.msra.mxu0 %v991
      %1027 = vmatpush.msra.mxu0 %v964
      %1028 = vmatpush.msra.mxu0 %v953
      %1029 = vmatpush.msra.mxu0 %v942
      %1030 = vmatpush.msra.mxu0 %v931
      %1031 = vmatmul.f32.gmra.mxu0 %v987
      %v1032 = vpop.f32.mrf.mxu0
      %v1033 = vadd.f32 0.0, %v1032
      %1034 = vdwg.mxu0
      %1035 = vmatpush.msra.mxu0 0.0
      %1036 = vmatpush.msra.mxu0 0.0
      %1037 = vmatpush.msra.mxu0 0.0
      %1038 = vmatpush.msra.mxu0 0.0
      %1039 = vmatpush.msra.mxu0 0.0
      %1040 = vmatpush.msra.mxu0 0.0
      %1041 = vmatpush.msra.mxu0 0.0
      %1042 = vmatpush.msra.mxu0 0.0
      %1043 = vmatpush.msra.mxu0 0.0
      %1044 = vmatpush.msra.mxu0 0.0
      %1045 = vmatpush.msra.mxu0 0.0
      %1046 = vmatpush.msra.mxu0 %v993
      %1047 = vmatpush.msra.mxu0 %v965
      %1048 = vmatpush.msra.mxu0 %v954
      %1049 = vmatpush.msra.mxu0 %v943
      %1050 = vmatpush.msra.mxu0 %v932
      %1051 = vmatmul.f32.gmra.mxu0 %v987
      %v1052 = vpop.f32.mrf.mxu0
      %v1053 = vadd.f32 0.0, %v1052
      %1054 = vdwg.mxu0
      %p1055 = scmp.eq.s32.totalorder %s22, 0
      // Predicated region
      $region33: #{unit_forward.2} parent=31 // pred_check
        %p1056 = pneg %p1055
      $region34: #{unit_forward.2} parent=31 // pred_check_branch
        %1058 = sbr.rel (%p1056) target = $region36
      $region35: #{unit_forward.2} parent=31 // pred_region
        %1059 = vst [vmem:[#allocation2] sm:$0xff] 0.0
        %1060 = vst [vmem:[#allocation2 + $0x8] sm:$0xff] 0.0
        %vm1061 = vcmask 261120
        %1062 = vst.msk [vmem:[#allocation2 + $0x10] sm:$0xff] %vm1061, 0.0
      $region36: #{unit_forward.2} parent=31 // pred_fallthru
        _
      %v1063 = vld [vmem:[#allocation2] sm:$0xff]
      %v1064 = vld [vmem:[#allocation2 + $0x8] sm:$0xff]
      %v1065 = vld [vmem:[#allocation2 + $0x10] sm:$0xff]
      %v1066 = vadd.f32 %v1063, %v1013
      %v1067 = vadd.f32 %v1064, %v1033
      %v1068 = vadd.f32 %v1065, %v1053
      %1069 = vst [vmem:[#allocation2] sm:$0xff] %v1066
      %1070 = vst [vmem:[#allocation2 + $0x8] sm:$0xff] %v1067
      %vm1071 = vcmask 261120
      %1072 = vst.msk [vmem:[#allocation2 + $0x10] sm:$0xff] %vm1071, %v1068
      // Predicated region
      $region37: #{unit_forward.2} parent=31 // pred_check
        %p1073 = pneg %p1055
      $region38: #{unit_forward.2} parent=31 // pred_check_branch
        %1075 = sbr.rel (%p1073) target = $region40
      $region39: #{unit_forward.2} parent=31 // pred_region
        %v1076 = vld [vmem:[#allocation2] sm:$0xff]
        %v1077 = vld [vmem:[#allocation2 + $0x8] sm:$0xff]
        %v1078 = vld [vmem:[#allocation2 + $0x10] sm:$0xff]
        %v1079 = vld [vmem:[%s2] sm:$0xff]
        %1081 = vset.pattern.permute.xlu0 0
        %1082 = vperm.xlu0 %1081, %v1079
        %v1083 = vpop.permute.xlu0 %1082
        %v1085 = vadd.f32 %v1076, %v1083
        %v1086 = vadd.f32 %v1077, %v1083
        %v1087 = vadd.f32 %v1078, %v1083
        %1088 = vst [vmem:[%s280] sm:$0xff] %v1085
        %1089 = vst [vmem:[%s280 + $0x8] sm:$0xff] %v1086
        %1090 = vst.msk [vmem:[%s280 + $0x10] sm:$0xff] %vm1071, %v1087
        %v1091 = vlaneseq
        %v1092 = vand.u32 %v1091, 127
        %v1093 = vadd.s32 %v1092, 128
        %v1094 = vadd.s32 %v1092, 256
        %vm1095 = vcmp.lt.s32.totalorder %v1092, 0
        %v1096 = vsub.s32 0, %v1092
        %v1097 = vsel %vm1095, %v1096, %v1092
        %v1098 = vand.u32 %v1097, 65535
        %v1099 = vshrl.u32 %v1097, 16
        %v1101 = vmul.u32 %v1098, 14564
        %v1102 = vmul.u32 %v1098, 58254
        %v1103 = vmul.u32 %v1099, 14564
        %v1104 = vmul.u32 %v1099, 58254
        %v1105 = vshll.u32 %v1102, 16
        %v1106 = vshrl.u32 %v1102, 16
        %v1107 = vshll.u32 %v1103, 16
        %v1108 = vshrl.u32 %v1103, 16
        %vm1109 = vc.u32 %v1101, %v1105
        %v1110 = vsel %vm1109, 1, 0
        %v1111 = vadd.s32 %v1101, %v1105
        %v1112 = vadd.s32 %v1104, %v1110
        %vm1113 = vc.u32 %v1111, %v1107
        %v1114 = vsel %vm1113, 1, 0
        %v1115 = vadd.s32 %v1111, %v1107
        %v1116 = vadd.s32 %v1112, %v1114
        %v1117 = vadd.s32 %v1116, %v1106
        %v1118 = vadd.s32 %v1117, %v1108
        %v1119 = vshrl.u32 %v1118, 4
        %v1120 = vmul.u32 %v1119, 18
        %v1121 = vsub.s32 %v1097, %v1120
        %v1122 = vsub.s32 0, %v1121
        %v1123 = vsel %vm1095, %v1122, %v1121
        %vm1124 = vcmp.lt.s32.totalorder %v1093, 0
        %v1125 = vsub.s32 0, %v1093
        %v1126 = vsel %vm1124, %v1125, %v1093
        %v1127 = vand.u32 %v1126, 65535
        %v1128 = vshrl.u32 %v1126, 16
        %v1130 = vmul.u32 %v1127, 14564
        %v1131 = vmul.u32 %v1127, 58254
        %v1132 = vmul.u32 %v1128, 14564
        %v1133 = vmul.u32 %v1128, 58254
        %v1134 = vshll.u32 %v1131, 16
        %v1135 = vshrl.u32 %v1131, 16
        %v1136 = vshll.u32 %v1132, 16
        %v1137 = vshrl.u32 %v1132, 16
        %vm1138 = vc.u32 %v1130, %v1134
        %v1139 = vsel %vm1138, 1, 0
        %v1140 = vadd.s32 %v1130, %v1134
        %v1141 = vadd.s32 %v1133, %v1139
        %vm1142 = vc.u32 %v1140, %v1136
        %v1143 = vsel %vm1142, 1, 0
        %v1144 = vadd.s32 %v1140, %v1136
        %v1145 = vadd.s32 %v1141, %v1143
        %v1146 = vadd.s32 %v1145, %v1135
        %v1147 = vadd.s32 %v1146, %v1137
        %v1148 = vshrl.u32 %v1147, 4
        %v1149 = vmul.u32 %v1148, 18
        %v1150 = vsub.s32 %v1126, %v1149
        %v1151 = vsub.s32 0, %v1150
        %v1152 = vsel %vm1124, %v1151, %v1150
        %vm1153 = vcmp.lt.s32.totalorder %v1094, 0
        %v1154 = vsub.s32 0, %v1094
        %v1155 = vsel %vm1153, %v1154, %v1094
        %v1156 = vand.u32 %v1155, 65535
        %v1157 = vshrl.u32 %v1155, 16
        %v1159 = vmul.u32 %v1156, 14564
        %v1160 = vmul.u32 %v1156, 58254
        %v1161 = vmul.u32 %v1157, 14564
        %v1162 = vmul.u32 %v1157, 58254
        %v1163 = vshll.u32 %v1160, 16
        %v1164 = vshrl.u32 %v1160, 16
        %v1165 = vshll.u32 %v1161, 16
        %v1166 = vshrl.u32 %v1161, 16
        %vm1167 = vc.u32 %v1159, %v1163
        %v1168 = vsel %vm1167, 1, 0
        %v1169 = vadd.s32 %v1159, %v1163
        %v1170 = vadd.s32 %v1162, %v1168
        %vm1171 = vc.u32 %v1169, %v1165
        %v1172 = vsel %vm1171, 1, 0
        %v1173 = vadd.s32 %v1169, %v1165
        %v1174 = vadd.s32 %v1170, %v1172
        %v1175 = vadd.s32 %v1174, %v1164
        %v1176 = vadd.s32 %v1175, %v1166
        %v1177 = vshrl.u32 %v1176, 4
        %v1178 = vmul.u32 %v1177, 18
        %v1179 = vsub.s32 %v1155, %v1178
        %v1180 = vsub.s32 0, %v1179
        %v1181 = vsel %vm1153, %v1180, %v1179
        %vm1182 = vcmp.ne.s32.totalorder %v1123, 0
        %vm1183 = vcmp.ne.s32.totalorder %v1152, 0
        %vm1184 = vcmp.ne.s32.totalorder %v1181, 0
        %vm1185 = vcmp.lt.s32.totalorder %v1123, 0
        %vm1186 = vcmp.lt.s32.totalorder %v1152, 0
        %vm1187 = vcmp.lt.s32.totalorder %v1181, 0
        %vm1188 = vmand %vm1185, %vm1182
        %vm1189 = vmand %vm1186, %vm1183
        %vm1190 = vmand %vm1187, %vm1184
        %v1191 = vadd.s32 %v1123, 18
        %v1192 = vadd.s32 %v1152, 18
        %v1193 = vadd.s32 %v1181, 18
        %v1194 = vsel %vm1188, %v1191, %v1123
        %v1195 = vsel %vm1189, %v1192, %v1152
        %v1196 = vsel %vm1190, %v1193, %v1181
        %vm1197 = vcmp.lt.s32.totalorder %v1194, 16
        %vm1198 = vcmp.lt.s32.totalorder %v1195, 16
        %vm1199 = vcmp.lt.s32.totalorder %v1196, 16
        %v1200 = vsel %vm1197, %v1085, 0.0
        %v1201 = vsel %vm1198, %v1086, 0.0
        %v1202 = vsel %vm1199, %v1087, 0.0
        %v1203 = vadd.f32 %v1200, %v1201
        %v1204 = vsel %vm1071, %v1202, 0.0
        %v1205 = vadd.f32 %v1203, %v1204
        %1206 = vadd.xlane.f32.xlu0 %v1205
        %v1207 = vpop.xlane.xlu0 %1206
        %vm1208 = vcmask 7168
        %1209 = vst.msk [vmem:[%s284] sm:$0xff] %vm1208, %v1207
        %v1210 = vmul.f32 %v1200, %v1200
        %v1211 = vmul.f32 %v1201, %v1201
        %v1212 = vmul.f32 %v1202, %v1202
        %v1213 = vadd.f32 %v1210, %v1211
        %v1214 = vsel %vm1071, %v1212, 0.0
        %v1215 = vadd.f32 %v1213, %v1214
        %1216 = vadd.xlane.f32.xlu0 %v1215
        %v1217 = vpop.xlane.xlu0 %1216
        %1218 = vst.msk [vmem:[%s288] sm:$0xff] %vm1208, %v1217
      $region40: #{unit_forward.2} parent=31 // pred_fallthru
        _
      %p1219 = scmp.lt.s32.totalorder %s21, 1
      %s1220 = scalar_select %p1219, %s21, 1
      %s1221 = smul.addr %s1220, 3
      %s1222 = smul.addr %s1221, 8
      %s1223 = scalar_lea.vmem %s3, %s1222
      %p1224 = scmp.lt.s32.totalorder %s21, 1
      %s1225 = scalar_select %p1224, %s21, 1
      %s1226 = smul.addr %s1225, 8
      %s1227 = scalar_lea.vmem %s4, %s1226
      %p1228 = scmp.lt.s32.totalorder %s21, 1
      %s1229 = scalar_select %p1228, %s21, 1
      %s1230 = smul.addr %s1229, 8
      %s1231 = scalar_lea.vmem %s5, %s1230
      // Predicated region
      $region41: #{unit_forward.2} parent=31 // pred_check
        %p1232 = pneg %p122
      $region42: #{unit_forward.2} parent=31 // pred_check_branch
        %1234 = sbr.rel (%p1232) target = $region44
      $region43: #{unit_forward.2} parent=31 // pred_region
        _
      $region44: #{unit_forward.2} parent=31 // pred_fallthru
        _
      // Predicated region
      $region45: #{unit_forward.2} parent=31 // pred_check
        %p1235 = pneg %p148
      $region46: #{unit_forward.2} parent=31 // pred_check_branch
        %1237 = sbr.rel (%p1235) target = $region48
      $region47: #{unit_forward.2} parent=31 // pred_region
        _
      $region48: #{unit_forward.2} parent=31 // pred_fallthru
        _
      // Predicated region
      $region49: #{unit_forward.2} parent=31 // pred_check
        %p1238 = pneg %p174
      $region50: #{unit_forward.2} parent=31 // pred_check_branch
        %1240 = sbr.rel (%p1238) target = $region52
      $region51: #{unit_forward.2} parent=31 // pred_region
        _
      $region52: #{unit_forward.2} parent=31 // pred_fallthru
        _
    $region32: #{unit_forward.2} parent=5 // pred_fallthru
      _
    %p1241 = scmp.le.s32.totalorder 2, %s12
    // Predicated region
    $region53: #{unit_forward.2} parent=5 // pred_check
      %p1242 = pneg %p1241
    $region54: #{unit_forward.2} parent=5 // pred_check_branch
      %1244 = sbr.rel (%p1242) target = $region56
    $region55: #{unit_forward.2} parent=5 // pred_region
      %s1245 = ssub.s32 %s12, 2
      // Predicated region
      $region57: #{unit_forward.2} parent=55 // pred_check
        %p1246 = pneg %p128
      $region58: #{unit_forward.2} parent=55 // pred_check_branch
        %1248 = sbr.rel (%p1246) target = $region60
      $region59: #{unit_forward.2} parent=55 // pred_region
        %p1249 = scmp.lt.s32.totalorder %s23, 1
        %s1250 = scalar_select %p1249, %s23, 1
        %s1251 = smul.addr %s1250, 3
        %s1252 = smul.addr %s1251, 8
        %s1253 = scalar_lea.vmem %s3, %s1252
      $region60: #{unit_forward.2} parent=55 // pred_fallthru
        _
      // Predicated region
      $region61: #{unit_forward.2} parent=55 // pred_check
        %p1254 = pneg %p154
      $region62: #{unit_forward.2} parent=55 // pred_check_branch
        %1256 = sbr.rel (%p1254) target = $region64
      $region63: #{unit_forward.2} parent=55 // pred_region
        %p1257 = scmp.lt.s32.totalorder %s23, 1
        %s1258 = scalar_select %p1257, %s23, 1
        %s1259 = smul.addr %s1258, 8
        %s1260 = scalar_lea.vmem %s4, %s1259
      $region64: #{unit_forward.2} parent=55 // pred_fallthru
        _
      // Predicated region
      $region65: #{unit_forward.2} parent=55 // pred_check
        %p1261 = pneg %p180
      $region66: #{unit_forward.2} parent=55 // pred_check_branch
        %1263 = sbr.rel (%p1261) target = $region68
      $region67: #{unit_forward.2} parent=55 // pred_region
        %p1264 = scmp.lt.s32.totalorder %s23, 1
        %s1265 = scalar_select %p1264, %s23, 1
        %s1266 = smul.addr %s1265, 8
        %s1267 = scalar_lea.vmem %s5, %s1266
      $region68: #{unit_forward.2} parent=55 // pred_fallthru
        _
    $region56: #{unit_forward.2} parent=5 // pred_fallthru
      _
  $region6: #{unit_forward.2} parent=0 // loop_footer
    %s16 = sadd.s32 1, %s12
  $region7: #{unit_forward.2} parent=0 // loop_footer_branch
    %11 = sbr.rel target = $region3
  $region8: #{unit_forward.2} parent=0 // loop_exit
    _

</llo_original>
